<compile_context>
chip_gen: v6e
topology: v6e:2x2x1
jax: 0.10.0
libtpu: 0.0.40
codegen_flags: <defaults>
</compile_context>

<pallas_src>
import jax
import jax.numpy as jnp
from jax import lax
from jax.experimental import pallas as pl
from jax.experimental.pallas import tpu as pltpu


def _round_up(v, m):
    return (v + m - 1) // m * m


def _lstm_recurrence_kernel(gx_ref, whh_ref, wlin_ref, blin_ref, out_ref, h_sc, c_sc):
    """One (batch-tile, time-chunk) grid step of the layer-0 LSTM recurrence + linear head.

    gx_ref:   (Tc, 4H, BB)  precomputed input projection + bias, batch on lanes
    whh_ref:  (4H, H)       hidden->gates weights, PyTorch gate order [i|f|g|o] along rows
    wlin_ref: (H, 1)        linear head weight column
    blin_ref: (1, 1)        linear head bias
    out_ref:  (1, 1, BB)    lane-dense output row for this batch tile
    h_sc/c_sc:(H, BB)       hidden / cell state carried across the time-chunk grid axis
    """
    t_chunk = pl.program_id(1)
    Tc, _, BB = gx_ref.shape
    H = whh_ref.shape[1]

    @pl.when(t_chunk == 0)
    def _():
        h_sc[...] = jnp.zeros_like(h_sc)
        c_sc[...] = jnp.zeros_like(c_sc)

    def step(s, carry):
        h, c = carry
        # Single (4H, H) x (H, BB) MXU matmul on the sequential critical path; W_hh is read
        # from VMEM each step instead of being held live across the whole (unrolled) loop.
        gates = gx_ref[s] + jnp.dot(whh_ref[...], h, preferred_element_type=jnp.float32)
        # Gate blocks sit on sublanes at offsets 0/H/2H/3H (multiples of 8 for H=32), so the
        # split is a whole-vreg selection -- no lane padding, no lane shuffles.
        i_g = jax.nn.sigmoid(gates[0 * H:1 * H])
        f_g = jax.nn.sigmoid(gates[1 * H:2 * H])
        g_g = jnp.tanh(gates[2 * H:3 * H])
        o_g = jax.nn.sigmoid(gates[3 * H:4 * H])
        c_new = f_g * c + i_g * g_g
        h_new = o_g * jnp.tanh(c_new)
        return h_new, c_new

    # Full unroll only when the live state is small; partial unroll otherwise (vreg pressure,
    # matters most on v5e with a single vector-store slot).
    unroll = True if (Tc <= 16 and BB <= 128) else 2
    h_fin, c_fin = lax.fori_loop(0, Tc, step, (h_sc[...], c_sc[...]), unroll=unroll)
    h_sc[...] = h_fin
    c_sc[...] = c_fin

    @pl.when(t_chunk == pl.num_programs(1) - 1)
    def _():
        # Linear head: VPU multiply + sublane reduction -> one lane-dense (1, BB) output row.
        head = jnp.sum(h_fin * wlin_ref[...], axis=0, keepdims=True) + blin_ref[...]
        out_ref[...] = head[None]


def shallow_regression_lstm_forward(x, params):
    """x: (B, T, num_sensors) float32, batch-first like PyTorch. Returns (B,)."""
    w_ih, w_hh, b_ih, b_hh, w_lin, b_lin = params
    B, T, N = x.shape
    H = w_hh.shape[1]          # hidden_units (multiple of 8 keeps gate splits vreg-aligned)
    G = 4 * H                  # packed gate slab width (i|f|g|o) along sublanes; no padding

    # --- batch tiling (batch lives on the lane axis) ---
    Bp8 = _round_up(B, 8)
    if Bp8 <= 128:
        BB = Bp8               # one tile; block width == full array width, so any size is legal
    elif Bp8 <= 1024:
        BB = 128               # lane-dense tiles; >= 2 tiles also feeds v7x's second TensorCore
    else:
        BB = 256               # fill the 256-wide MXU on v6e/v7x for very large batches
    Bp = _round_up(B, BB)
    nb = Bp // BB

    # --- time chunking: keep each streamed gx block <= ~2 MiB (v7x has only 64 MiB VMEM) ---
    bytes_per_step = G * BB * 4
    max_tc = max(1, (2 * 1024 * 1024) // bytes_per_step)
    if T <= max_tc:
        Tc = T
    else:
        Tc = 1
        for cand in range(min(T, max_tc), 0, -1):
            if T % cand == 0:
                Tc = cand
                break
    nT = T // Tc

    hp = jax.lax.Precision.HIGHEST
    w_ih = jnp.asarray(w_ih, jnp.float32)                                   # (4H, N)
    w_hh = jnp.asarray(w_hh, jnp.float32)                                   # (4H, H)
    b_sum = jnp.asarray(b_ih, jnp.float32) + jnp.asarray(b_hh, jnp.float32)  # (4H,)
    wlin_col = jnp.asarray(w_lin, jnp.float32).reshape(H, 1)
    blin = jnp.asarray(b_lin, jnp.float32).reshape(1, 1)

    # --- input projection precomputed by XLA (fully parallel; off the serial critical path) ---
    gx = jnp.einsum("btn,gn->tgb", x.astype(jnp.float32), w_ih, precision=hp)  # (T, 4H, B)
    gx = gx + b_sum[None, :, None]
    gx = jnp.pad(gx, ((0, 0), (0, 0), (0, Bp - B)))                            # (T, 4H, Bp)

    grid_spec = pltpu.PrefetchScalarGridSpec(
        num_scalar_prefetch=0,
        grid=(nb, nT),
        in_specs=[
            pl.BlockSpec((Tc, G, BB), lambda j, t: (t, 0, j)),   # streamed gx chunks
            pl.BlockSpec((G, H), lambda j, t: (0, 0)),           # resident W_hh
            pl.BlockSpec((H, 1), lambda j, t: (0, 0)),           # resident head weight
            pl.BlockSpec((1, 1), lambda j, t: (0, 0)),           # head bias
        ],
        out_specs=pl.BlockSpec((1, 1, BB), lambda j, t: (j, 0, 0)),
        scratch_shapes=[
            pltpu.VMEM((H, BB), jnp.float32),                    # h, carried across time chunks
            pltpu.VMEM((H, BB), jnp.float32),                    # c, carried across time chunks
        ],
    )

    gx_block_bytes = Tc * G * BB * 4
    out = pl.pallas_call(
        _lstm_recurrence_kernel,
        grid_spec=grid_spec,
        out_shape=jax.ShapeDtypeStruct((nb, 1, BB), jnp.float32),
        compiler_params=pltpu.CompilerParams(
            dimension_semantics=("parallel", "arbitrary"),
            vmem_limit_bytes=int(4 * gx_block_bytes + 8 * 1024 * 1024),
        ),
    )(gx, w_hh, wlin_col, blin)

    return out.reshape(Bp)[:B]      # .flatten() -> (B,)


def _reference_forward(x, params):
    """Pure-JAX reference of the PyTorch forward (layer-0 LSTM + linear on hn[0])."""
    w_ih, w_hh, b_ih, b_hh, w_lin, b_lin = params
    B, T, N = x.shape
    H = w_hh.shape[1]
    hp = jax.lax.Precision.HIGHEST

    def step(carry, x_t):
        h, c = carry
        gates = (jnp.dot(x_t, w_ih.T, precision=hp)
                 + jnp.dot(h, w_hh.T, precision=hp) + b_ih + b_hh)
        i_g = jax.nn.sigmoid(gates[:, :H])
        f_g = jax.nn.sigmoid(gates[:, H:2 * H])
        g_g = jnp.tanh(gates[:, 2 * H:3 * H])
        o_g = jax.nn.sigmoid(gates[:, 3 * H:])
        c = f_g * c + i_g * g_g
        h = o_g * jnp.tanh(c)
        return (h, c), None

    (h, _), _ = lax.scan(
        step,
        (jnp.zeros((B, H), jnp.float32), jnp.zeros((B, H), jnp.float32)),
        jnp.transpose(x, (1, 0, 2)),
    )
    return (jnp.dot(h, w_lin.T, precision=hp) + b_lin).reshape(-1)


def init_params(key, num_sensors, hidden_units):
    """Deterministic synthetic init matching PyTorch parameter shapes
    (uniform(-1/sqrt(H), 1/sqrt(H)) like nn.LSTM / nn.Linear defaults)."""
    H, N = hidden_units, num_sensors
    k = 1.0 / jnp.sqrt(jnp.float32(H))
    keys = jax.random.split(key, 6)
    w_ih = jax.random.uniform(keys[0], (4 * H, N), jnp.float32, -k, k)   # weight_ih_l0
    w_hh = jax.random.uniform(keys[1], (4 * H, H), jnp.float32, -k, k)   # weight_hh_l0
    b_ih = jax.random.uniform(keys[2], (4 * H,), jnp.float32, -k, k)     # bias_ih_l0
    b_hh = jax.random.uniform(keys[3], (4 * H,), jnp.float32, -k, k)     # bias_hh_l0
    w_lin = jax.random.uniform(keys[4], (1, H), jnp.float32, -k, k)      # linear.weight
    b_lin = jax.random.uniform(keys[5], (1,), jnp.float32, -k, k)        # linear.bias
    return (w_ih, w_hh, b_ih, b_hh, w_lin, b_lin)


if __name__ == "__main__":
    # Small shapes consistent with the module: batch=2, seq=8, num_sensors=4, hidden=32.
    # (num_layers=2 in the original config: layers >= 1 never reach hn[0], so only layer 0 runs.)
    BATCH, SEQ, NUM_SENSORS, HIDDEN = 2, 8, 4, 32

    key = jax.random.PRNGKey(0)
    key_x, key_p = jax.random.split(key)
    x = jax.random.normal(key_x, (BATCH, SEQ, NUM_SENSORS), dtype=jnp.float32)
    params = init_params(key_p, NUM_SENSORS, HIDDEN)

    fwd = jax.jit(shallow_regression_lstm_forward)
    out = jax.block_until_ready(fwd(x, params))
    ref = jax.block_until_ready(_reference_forward(x, params))

    assert out.shape == (BATCH,), out.shape
    # f32 math end to end; expected mismatch is ~1e-6.  The tolerance leaves headroom for the
    # MXU's f32-operand pass decomposition and EUP transcendental differences vs XLA.
    assert jnp.allclose(out, ref, rtol=5e-3, atol=5e-3), (out, ref)

    print("KERNEL_OK")
</pallas_src>

<mosaic_0001>
module attributes {stable_mosaic.version = 11 : i64} {
  func.func @_lstm_recurrence_kernel(%arg0: i32, %arg1: i32, %arg2: memref<8x128x8xf32, #tpu.memory_space<vmem>>, %arg3: memref<128x32xf32, #tpu.memory_space<vmem>>, %arg4: memref<32x1xf32, #tpu.memory_space<vmem>>, %arg5: memref<1x1xf32, #tpu.memory_space<vmem>>, %arg6: memref<1x1x8xf32, #tpu.memory_space<vmem>>, %arg7: memref<32x8xf32, #tpu.memory_space<vmem>>, %arg8: memref<32x8xf32, #tpu.memory_space<vmem>>) attributes {dimension_semantics = [#tpu.dimension_semantics<parallel>, #tpu.dimension_semantics<arbitrary>], iteration_bounds = array<i64: 1, 1>, scalar_prefetch = 0 : i64, scratch_operands = 2 : i64, tpu.core_type = #tpu.core_type<tc>, window_params = [{transform_indices = @transform_0, window_bounds = array<i64: 8, 128, 8>}, {pipeline_mode = #tpu.pipeline_mode<synchronous>, transform_indices = @transform_1, window_bounds = array<i64: 128, 32>}, {pipeline_mode = #tpu.pipeline_mode<synchronous>, transform_indices = @transform_2, window_bounds = array<i64: 32, 1>}, {pipeline_mode = #tpu.pipeline_mode<synchronous>, transform_indices = @transform_3, window_bounds = array<i64: 1, 1>}, {transform_indices = @transform_4, window_bounds = array<i64: 1, 1, 8>}]} {
    %c0_i32 = arith.constant 0 : i32
    %0 = arith.cmpi eq, %arg1, %c0_i32 : i32
    %1 = arith.extui %0 : i1 to i32
    %c0_i32_0 = arith.constant 0 : i32
    %2 = arith.cmpi ne, %1, %c0_i32_0 : i32
    scf.if %2 {
      %cst_74 = arith.constant 0.000000e+00 : f32
      %258 = vector.broadcast %cst_74 : f32 to vector<32x8xf32>
      %c0_75 = arith.constant 0 : index
      %c0_76 = arith.constant 0 : index
      %259 = vector.load %arg7[%c0_75, %c0_76] : memref<32x8xf32, #tpu.memory_space<vmem>>, vector<32x8xf32>
      tpu.vector_store %arg7[%c0_75, %c0_76], %258 {strides = array<i32>} : memref<32x8xf32, #tpu.memory_space<vmem>>, vector<32x8xf32>,
      %cst_77 = arith.constant 0.000000e+00 : f32
      %260 = vector.broadcast %cst_77 : f32 to vector<32x8xf32>
      %c0_78 = arith.constant 0 : index
      %c0_79 = arith.constant 0 : index
      %261 = vector.load %arg8[%c0_78, %c0_79] : memref<32x8xf32, #tpu.memory_space<vmem>>, vector<32x8xf32>
      tpu.vector_store %arg8[%c0_78, %c0_79], %260 {strides = array<i32>} : memref<32x8xf32, #tpu.memory_space<vmem>>, vector<32x8xf32>,
    } else {
    }
    %c0 = arith.constant 0 : index
    %c0_1 = arith.constant 0 : index
    %3 = vector.load %arg7[%c0, %c0_1] : memref<32x8xf32, #tpu.memory_space<vmem>>, vector<32x8xf32>
    %c0_2 = arith.constant 0 : index
    %c0_3 = arith.constant 0 : index
    %4 = vector.load %arg8[%c0_2, %c0_3] : memref<32x8xf32, #tpu.memory_space<vmem>>, vector<32x8xf32>
    %c0_i32_4 = arith.constant 0 : i32
    %5 = arith.index_cast %c0_i32_4 : i32 to index
    %c0_5 = arith.constant 0 : index
    %c0_6 = arith.constant 0 : index
    %6 = vector.load %arg2[%5, %c0_5, %c0_6] : memref<8x128x8xf32, #tpu.memory_space<vmem>>, vector<1x128x8xf32>
    %7 = vector.shape_cast %6 : vector<1x128x8xf32> to vector<128x8xf32>
    %c0_7 = arith.constant 0 : index
    %c0_8 = arith.constant 0 : index
    %8 = vector.load %arg3[%c0_7, %c0_8] : memref<128x32xf32, #tpu.memory_space<vmem>>, vector<128x32xf32>
    %cst = arith.constant dense<0.000000e+00> : vector<128x8xf32>
    %9 = tpu.matmul %8, %3, %cst {dimension_numbers = #tpu.dot_dimension_numbers<[1], [0], [0], [1], [0, 0, 1, 1], [], []>} : vector<128x32xf32>, vector<32x8xf32>, vector<128x8xf32> -> vector<128x8xf32>
    %10 = arith.addf %7, %9 : vector<128x8xf32>
    %11 = vector.extract_strided_slice %10 {offsets = [0, 0], sizes = [32, 8], strides = [1, 1]} : vector<128x8xf32> to vector<32x8xf32>
    %12 = arith.negf %11 : vector<32x8xf32>
    %13 = math.exp %12 : vector<32x8xf32>
    %cst_9 = arith.constant 1.000000e+00 : f32
    %14 = vector.broadcast %cst_9 : f32 to vector<32x8xf32>
    %15 = arith.addf %14, %13 : vector<32x8xf32>
    %16 = arith.divf %14, %15 : vector<32x8xf32>
    %17 = vector.extract_strided_slice %10 {offsets = [32, 0], sizes = [32, 8], strides = [1, 1]} : vector<128x8xf32> to vector<32x8xf32>
    %18 = arith.negf %17 : vector<32x8xf32>
    %19 = math.exp %18 : vector<32x8xf32>
    %cst_10 = arith.constant 1.000000e+00 : f32
    %20 = vector.broadcast %cst_10 : f32 to vector<32x8xf32>
    %21 = arith.addf %20, %19 : vector<32x8xf32>
    %22 = arith.divf %20, %21 : vector<32x8xf32>
    %23 = vector.extract_strided_slice %10 {offsets = [64, 0], sizes = [32, 8], strides = [1, 1]} : vector<128x8xf32> to vector<32x8xf32>
    %24 = math.tanh %23 : vector<32x8xf32>
    %25 = vector.extract_strided_slice %10 {offsets = [96, 0], sizes = [32, 8], strides = [1, 1]} : vector<128x8xf32> to vector<32x8xf32>
    %26 = arith.negf %25 : vector<32x8xf32>
    %27 = math.exp %26 : vector<32x8xf32>
    %cst_11 = arith.constant 1.000000e+00 : f32
    %28 = vector.broadcast %cst_11 : f32 to vector<32x8xf32>
    %29 = arith.addf %28, %27 : vector<32x8xf32>
    %30 = arith.divf %28, %29 : vector<32x8xf32>
    %31 = arith.mulf %22, %4 : vector<32x8xf32>
    %32 = arith.mulf %16, %24 : vector<32x8xf32>
    %33 = arith.addf %31, %32 : vector<32x8xf32>
    %34 = math.tanh %33 : vector<32x8xf32>
    %35 = arith.mulf %30, %34 : vector<32x8xf32>
    %c1_i32 = arith.constant 1 : i32
    %36 = arith.index_cast %c1_i32 : i32 to index
    %c0_12 = arith.constant 0 : index
    %c0_13 = arith.constant 0 : index
    %37 = vector.load %arg2[%36, %c0_12, %c0_13] : memref<8x128x8xf32, #tpu.memory_space<vmem>>, vector<1x128x8xf32>
    %38 = vector.shape_cast %37 : vector<1x128x8xf32> to vector<128x8xf32>
    %c0_14 = arith.constant 0 : index
    %c0_15 = arith.constant 0 : index
    %39 = vector.load %arg3[%c0_14, %c0_15] : memref<128x32xf32, #tpu.memory_space<vmem>>, vector<128x32xf32>
    %cst_16 = arith.constant dense<0.000000e+00> : vector<128x8xf32>
    %40 = tpu.matmul %39, %35, %cst_16 {dimension_numbers = #tpu.dot_dimension_numbers<[1], [0], [0], [1], [0, 0, 1, 1], [], []>} : vector<128x32xf32>, vector<32x8xf32>, vector<128x8xf32> -> vector<128x8xf32>
    %41 = arith.addf %38, %40 : vector<128x8xf32>
    %42 = vector.extract_strided_slice %41 {offsets = [0, 0], sizes = [32, 8], strides = [1, 1]} : vector<128x8xf32> to vector<32x8xf32>
    %43 = arith.negf %42 : vector<32x8xf32>
    %44 = math.exp %43 : vector<32x8xf32>
    %cst_17 = arith.constant 1.000000e+00 : f32
    %45 = vector.broadcast %cst_17 : f32 to vector<32x8xf32>
    %46 = arith.addf %45, %44 : vector<32x8xf32>
    %47 = arith.divf %45, %46 : vector<32x8xf32>
    %48 = vector.extract_strided_slice %41 {offsets = [32, 0], sizes = [32, 8], strides = [1, 1]} : vector<128x8xf32> to vector<32x8xf32>
    %49 = arith.negf %48 : vector<32x8xf32>
    %50 = math.exp %49 : vector<32x8xf32>
    %cst_18 = arith.constant 1.000000e+00 : f32
    %51 = vector.broadcast %cst_18 : f32 to vector<32x8xf32>
    %52 = arith.addf %51, %50 : vector<32x8xf32>
    %53 = arith.divf %51, %52 : vector<32x8xf32>
    %54 = vector.extract_strided_slice %41 {offsets = [64, 0], sizes = [32, 8], strides = [1, 1]} : vector<128x8xf32> to vector<32x8xf32>
    %55 = math.tanh %54 : vector<32x8xf32>
    %56 = vector.extract_strided_slice %41 {offsets = [96, 0], sizes = [32, 8], strides = [1, 1]} : vector<128x8xf32> to vector<32x8xf32>
    %57 = arith.negf %56 : vector<32x8xf32>
    %58 = math.exp %57 : vector<32x8xf32>
    %cst_19 = arith.constant 1.000000e+00 : f32
    %59 = vector.broadcast %cst_19 : f32 to vector<32x8xf32>
    %60 = arith.addf %59, %58 : vector<32x8xf32>
    %61 = arith.divf %59, %60 : vector<32x8xf32>
    %62 = arith.mulf %53, %33 : vector<32x8xf32>
    %63 = arith.mulf %47, %55 : vector<32x8xf32>
    %64 = arith.addf %62, %63 : vector<32x8xf32>
    %65 = math.tanh %64 : vector<32x8xf32>
    %66 = arith.mulf %61, %65 : vector<32x8xf32>
    %c2_i32 = arith.constant 2 : i32
    %67 = arith.index_cast %c2_i32 : i32 to index
    %c0_20 = arith.constant 0 : index
    %c0_21 = arith.constant 0 : index
    %68 = vector.load %arg2[%67, %c0_20, %c0_21] : memref<8x128x8xf32, #tpu.memory_space<vmem>>, vector<1x128x8xf32>
    %69 = vector.shape_cast %68 : vector<1x128x8xf32> to vector<128x8xf32>
    %c0_22 = arith.constant 0 : index
    %c0_23 = arith.constant 0 : index
    %70 = vector.load %arg3[%c0_22, %c0_23] : memref<128x32xf32, #tpu.memory_space<vmem>>, vector<128x32xf32>
    %cst_24 = arith.constant dense<0.000000e+00> : vector<128x8xf32>
    %71 = tpu.matmul %70, %66, %cst_24 {dimension_numbers = #tpu.dot_dimension_numbers<[1], [0], [0], [1], [0, 0, 1, 1], [], []>} : vector<128x32xf32>, vector<32x8xf32>, vector<128x8xf32> -> vector<128x8xf32>
    %72 = arith.addf %69, %71 : vector<128x8xf32>
    %73 = vector.extract_strided_slice %72 {offsets = [0, 0], sizes = [32, 8], strides = [1, 1]} : vector<128x8xf32> to vector<32x8xf32>
    %74 = arith.negf %73 : vector<32x8xf32>
    %75 = math.exp %74 : vector<32x8xf32>
    %cst_25 = arith.constant 1.000000e+00 : f32
    %76 = vector.broadcast %cst_25 : f32 to vector<32x8xf32>
    %77 = arith.addf %76, %75 : vector<32x8xf32>
    %78 = arith.divf %76, %77 : vector<32x8xf32>
    %79 = vector.extract_strided_slice %72 {offsets = [32, 0], sizes = [32, 8], strides = [1, 1]} : vector<128x8xf32> to vector<32x8xf32>
    %80 = arith.negf %79 : vector<32x8xf32>
    %81 = math.exp %80 : vector<32x8xf32>
    %cst_26 = arith.constant 1.000000e+00 : f32
    %82 = vector.broadcast %cst_26 : f32 to vector<32x8xf32>
    %83 = arith.addf %82, %81 : vector<32x8xf32>
    %84 = arith.divf %82, %83 : vector<32x8xf32>
    %85 = vector.extract_strided_slice %72 {offsets = [64, 0], sizes = [32, 8], strides = [1, 1]} : vector<128x8xf32> to vector<32x8xf32>
    %86 = math.tanh %85 : vector<32x8xf32>
    %87 = vector.extract_strided_slice %72 {offsets = [96, 0], sizes = [32, 8], strides = [1, 1]} : vector<128x8xf32> to vector<32x8xf32>
    %88 = arith.negf %87 : vector<32x8xf32>
    %89 = math.exp %88 : vector<32x8xf32>
    %cst_27 = arith.constant 1.000000e+00 : f32
    %90 = vector.broadcast %cst_27 : f32 to vector<32x8xf32>
    %91 = arith.addf %90, %89 : vector<32x8xf32>
    %92 = arith.divf %90, %91 : vector<32x8xf32>
    %93 = arith.mulf %84, %64 : vector<32x8xf32>
    %94 = arith.mulf %78, %86 : vector<32x8xf32>
    %95 = arith.addf %93, %94 : vector<32x8xf32>
    %96 = math.tanh %95 : vector<32x8xf32>
    %97 = arith.mulf %92, %96 : vector<32x8xf32>
    %c3_i32 = arith.constant 3 : i32
    %98 = arith.index_cast %c3_i32 : i32 to index
    %c0_28 = arith.constant 0 : index
    %c0_29 = arith.constant 0 : index
    %99 = vector.load %arg2[%98, %c0_28, %c0_29] : memref<8x128x8xf32, #tpu.memory_space<vmem>>, vector<1x128x8xf32>
    %100 = vector.shape_cast %99 : vector<1x128x8xf32> to vector<128x8xf32>
    %c0_30 = arith.constant 0 : index
    %c0_31 = arith.constant 0 : index
    %101 = vector.load %arg3[%c0_30, %c0_31] : memref<128x32xf32, #tpu.memory_space<vmem>>, vector<128x32xf32>
    %cst_32 = arith.constant dense<0.000000e+00> : vector<128x8xf32>
    %102 = tpu.matmul %101, %97, %cst_32 {dimension_numbers = #tpu.dot_dimension_numbers<[1], [0], [0], [1], [0, 0, 1, 1], [], []>} : vector<128x32xf32>, vector<32x8xf32>, vector<128x8xf32> -> vector<128x8xf32>
    %103 = arith.addf %100, %102 : vector<128x8xf32>
    %104 = vector.extract_strided_slice %103 {offsets = [0, 0], sizes = [32, 8], strides = [1, 1]} : vector<128x8xf32> to vector<32x8xf32>
    %105 = arith.negf %104 : vector<32x8xf32>
    %106 = math.exp %105 : vector<32x8xf32>
    %cst_33 = arith.constant 1.000000e+00 : f32
    %107 = vector.broadcast %cst_33 : f32 to vector<32x8xf32>
    %108 = arith.addf %107, %106 : vector<32x8xf32>
    %109 = arith.divf %107, %108 : vector<32x8xf32>
    %110 = vector.extract_strided_slice %103 {offsets = [32, 0], sizes = [32, 8], strides = [1, 1]} : vector<128x8xf32> to vector<32x8xf32>
    %111 = arith.negf %110 : vector<32x8xf32>
    %112 = math.exp %111 : vector<32x8xf32>
    %cst_34 = arith.constant 1.000000e+00 : f32
    %113 = vector.broadcast %cst_34 : f32 to vector<32x8xf32>
    %114 = arith.addf %113, %112 : vector<32x8xf32>
    %115 = arith.divf %113, %114 : vector<32x8xf32>
    %116 = vector.extract_strided_slice %103 {offsets = [64, 0], sizes = [32, 8], strides = [1, 1]} : vector<128x8xf32> to vector<32x8xf32>
    %117 = math.tanh %116 : vector<32x8xf32>
    %118 = vector.extract_strided_slice %103 {offsets = [96, 0], sizes = [32, 8], strides = [1, 1]} : vector<128x8xf32> to vector<32x8xf32>
    %119 = arith.negf %118 : vector<32x8xf32>
    %120 = math.exp %119 : vector<32x8xf32>
    %cst_35 = arith.constant 1.000000e+00 : f32
    %121 = vector.broadcast %cst_35 : f32 to vector<32x8xf32>
    %122 = arith.addf %121, %120 : vector<32x8xf32>
    %123 = arith.divf %121, %122 : vector<32x8xf32>
    %124 = arith.mulf %115, %95 : vector<32x8xf32>
    %125 = arith.mulf %109, %117 : vector<32x8xf32>
    %126 = arith.addf %124, %125 : vector<32x8xf32>
    %127 = math.tanh %126 : vector<32x8xf32>
    %128 = arith.mulf %123, %127 : vector<32x8xf32>
    %c4_i32 = arith.constant 4 : i32
    %129 = arith.index_cast %c4_i32 : i32 to index
    %c0_36 = arith.constant 0 : index
    %c0_37 = arith.constant 0 : index
    %130 = vector.load %arg2[%129, %c0_36, %c0_37] : memref<8x128x8xf32, #tpu.memory_space<vmem>>, vector<1x128x8xf32>
    %131 = vector.shape_cast %130 : vector<1x128x8xf32> to vector<128x8xf32>
    %c0_38 = arith.constant 0 : index
    %c0_39 = arith.constant 0 : index
    %132 = vector.load %arg3[%c0_38, %c0_39] : memref<128x32xf32, #tpu.memory_space<vmem>>, vector<128x32xf32>
    %cst_40 = arith.constant dense<0.000000e+00> : vector<128x8xf32>
    %133 = tpu.matmul %132, %128, %cst_40 {dimension_numbers = #tpu.dot_dimension_numbers<[1], [0], [0], [1], [0, 0, 1, 1], [], []>} : vector<128x32xf32>, vector<32x8xf32>, vector<128x8xf32> -> vector<128x8xf32>
    %134 = arith.addf %131, %133 : vector<128x8xf32>
    %135 = vector.extract_strided_slice %134 {offsets = [0, 0], sizes = [32, 8], strides = [1, 1]} : vector<128x8xf32> to vector<32x8xf32>
    %136 = arith.negf %135 : vector<32x8xf32>
    %137 = math.exp %136 : vector<32x8xf32>
    %cst_41 = arith.constant 1.000000e+00 : f32
    %138 = vector.broadcast %cst_41 : f32 to vector<32x8xf32>
    %139 = arith.addf %138, %137 : vector<32x8xf32>
    %140 = arith.divf %138, %139 : vector<32x8xf32>
    %141 = vector.extract_strided_slice %134 {offsets = [32, 0], sizes = [32, 8], strides = [1, 1]} : vector<128x8xf32> to vector<32x8xf32>
    %142 = arith.negf %141 : vector<32x8xf32>
    %143 = math.exp %142 : vector<32x8xf32>
    %cst_42 = arith.constant 1.000000e+00 : f32
    %144 = vector.broadcast %cst_42 : f32 to vector<32x8xf32>
    %145 = arith.addf %144, %143 : vector<32x8xf32>
    %146 = arith.divf %144, %145 : vector<32x8xf32>
    %147 = vector.extract_strided_slice %134 {offsets = [64, 0], sizes = [32, 8], strides = [1, 1]} : vector<128x8xf32> to vector<32x8xf32>
    %148 = math.tanh %147 : vector<32x8xf32>
    %149 = vector.extract_strided_slice %134 {offsets = [96, 0], sizes = [32, 8], strides = [1, 1]} : vector<128x8xf32> to vector<32x8xf32>
    %150 = arith.negf %149 : vector<32x8xf32>
    %151 = math.exp %150 : vector<32x8xf32>
    %cst_43 = arith.constant 1.000000e+00 : f32
    %152 = vector.broadcast %cst_43 : f32 to vector<32x8xf32>
    %153 = arith.addf %152, %151 : vector<32x8xf32>
    %154 = arith.divf %152, %153 : vector<32x8xf32>
    %155 = arith.mulf %146, %126 : vector<32x8xf32>
    %156 = arith.mulf %140, %148 : vector<32x8xf32>
    %157 = arith.addf %155, %156 : vector<32x8xf32>
    %158 = math.tanh %157 : vector<32x8xf32>
    %159 = arith.mulf %154, %158 : vector<32x8xf32>
    %c5_i32 = arith.constant 5 : i32
    %160 = arith.index_cast %c5_i32 : i32 to index
    %c0_44 = arith.constant 0 : index
    %c0_45 = arith.constant 0 : index
    %161 = vector.load %arg2[%160, %c0_44, %c0_45] : memref<8x128x8xf32, #tpu.memory_space<vmem>>, vector<1x128x8xf32>
    %162 = vector.shape_cast %161 : vector<1x128x8xf32> to vector<128x8xf32>
    %c0_46 = arith.constant 0 : index
    %c0_47 = arith.constant 0 : index
    %163 = vector.load %arg3[%c0_46, %c0_47] : memref<128x32xf32, #tpu.memory_space<vmem>>, vector<128x32xf32>
    %cst_48 = arith.constant dense<0.000000e+00> : vector<128x8xf32>
    %164 = tpu.matmul %163, %159, %cst_48 {dimension_numbers = #tpu.dot_dimension_numbers<[1], [0], [0], [1], [0, 0, 1, 1], [], []>} : vector<128x32xf32>, vector<32x8xf32>, vector<128x8xf32> -> vector<128x8xf32>
    %165 = arith.addf %162, %164 : vector<128x8xf32>
    %166 = vector.extract_strided_slice %165 {offsets = [0, 0], sizes = [32, 8], strides = [1, 1]} : vector<128x8xf32> to vector<32x8xf32>
    %167 = arith.negf %166 : vector<32x8xf32>
    %168 = math.exp %167 : vector<32x8xf32>
    %cst_49 = arith.constant 1.000000e+00 : f32
    %169 = vector.broadcast %cst_49 : f32 to vector<32x8xf32>
    %170 = arith.addf %169, %168 : vector<32x8xf32>
    %171 = arith.divf %169, %170 : vector<32x8xf32>
    %172 = vector.extract_strided_slice %165 {offsets = [32, 0], sizes = [32, 8], strides = [1, 1]} : vector<128x8xf32> to vector<32x8xf32>
    %173 = arith.negf %172 : vector<32x8xf32>
    %174 = math.exp %173 : vector<32x8xf32>
    %cst_50 = arith.constant 1.000000e+00 : f32
    %175 = vector.broadcast %cst_50 : f32 to vector<32x8xf32>
    %176 = arith.addf %175, %174 : vector<32x8xf32>
    %177 = arith.divf %175, %176 : vector<32x8xf32>
    %178 = vector.extract_strided_slice %165 {offsets = [64, 0], sizes = [32, 8], strides = [1, 1]} : vector<128x8xf32> to vector<32x8xf32>
    %179 = math.tanh %178 : vector<32x8xf32>
    %180 = vector.extract_strided_slice %165 {offsets = [96, 0], sizes = [32, 8], strides = [1, 1]} : vector<128x8xf32> to vector<32x8xf32>
    %181 = arith.negf %180 : vector<32x8xf32>
    %182 = math.exp %181 : vector<32x8xf32>
    %cst_51 = arith.constant 1.000000e+00 : f32
    %183 = vector.broadcast %cst_51 : f32 to vector<32x8xf32>
    %184 = arith.addf %183, %182 : vector<32x8xf32>
    %185 = arith.divf %183, %184 : vector<32x8xf32>
    %186 = arith.mulf %177, %157 : vector<32x8xf32>
    %187 = arith.mulf %171, %179 : vector<32x8xf32>
    %188 = arith.addf %186, %187 : vector<32x8xf32>
    %189 = math.tanh %188 : vector<32x8xf32>
    %190 = arith.mulf %185, %189 : vector<32x8xf32>
    %c6_i32 = arith.constant 6 : i32
    %191 = arith.index_cast %c6_i32 : i32 to index
    %c0_52 = arith.constant 0 : index
    %c0_53 = arith.constant 0 : index
    %192 = vector.load %arg2[%191, %c0_52, %c0_53] : memref<8x128x8xf32, #tpu.memory_space<vmem>>, vector<1x128x8xf32>
    %193 = vector.shape_cast %192 : vector<1x128x8xf32> to vector<128x8xf32>
    %c0_54 = arith.constant 0 : index
    %c0_55 = arith.constant 0 : index
    %194 = vector.load %arg3[%c0_54, %c0_55] : memref<128x32xf32, #tpu.memory_space<vmem>>, vector<128x32xf32>
    %cst_56 = arith.constant dense<0.000000e+00> : vector<128x8xf32>
    %195 = tpu.matmul %194, %190, %cst_56 {dimension_numbers = #tpu.dot_dimension_numbers<[1], [0], [0], [1], [0, 0, 1, 1], [], []>} : vector<128x32xf32>, vector<32x8xf32>, vector<128x8xf32> -> vector<128x8xf32>
    %196 = arith.addf %193, %195 : vector<128x8xf32>
    %197 = vector.extract_strided_slice %196 {offsets = [0, 0], sizes = [32, 8], strides = [1, 1]} : vector<128x8xf32> to vector<32x8xf32>
    %198 = arith.negf %197 : vector<32x8xf32>
    %199 = math.exp %198 : vector<32x8xf32>
    %cst_57 = arith.constant 1.000000e+00 : f32
    %200 = vector.broadcast %cst_57 : f32 to vector<32x8xf32>
    %201 = arith.addf %200, %199 : vector<32x8xf32>
    %202 = arith.divf %200, %201 : vector<32x8xf32>
    %203 = vector.extract_strided_slice %196 {offsets = [32, 0], sizes = [32, 8], strides = [1, 1]} : vector<128x8xf32> to vector<32x8xf32>
    %204 = arith.negf %203 : vector<32x8xf32>
    %205 = math.exp %204 : vector<32x8xf32>
    %cst_58 = arith.constant 1.000000e+00 : f32
    %206 = vector.broadcast %cst_58 : f32 to vector<32x8xf32>
    %207 = arith.addf %206, %205 : vector<32x8xf32>
    %208 = arith.divf %206, %207 : vector<32x8xf32>
    %209 = vector.extract_strided_slice %196 {offsets = [64, 0], sizes = [32, 8], strides = [1, 1]} : vector<128x8xf32> to vector<32x8xf32>
    %210 = math.tanh %209 : vector<32x8xf32>
    %211 = vector.extract_strided_slice %196 {offsets = [96, 0], sizes = [32, 8], strides = [1, 1]} : vector<128x8xf32> to vector<32x8xf32>
    %212 = arith.negf %211 : vector<32x8xf32>
    %213 = math.exp %212 : vector<32x8xf32>
    %cst_59 = arith.constant 1.000000e+00 : f32
    %214 = vector.broadcast %cst_59 : f32 to vector<32x8xf32>
    %215 = arith.addf %214, %213 : vector<32x8xf32>
    %216 = arith.divf %214, %215 : vector<32x8xf32>
    %217 = arith.mulf %208, %188 : vector<32x8xf32>
    %218 = arith.mulf %202, %210 : vector<32x8xf32>
    %219 = arith.addf %217, %218 : vector<32x8xf32>
    %220 = math.tanh %219 : vector<32x8xf32>
    %221 = arith.mulf %216, %220 : vector<32x8xf32>
    %c7_i32 = arith.constant 7 : i32
    %222 = arith.index_cast %c7_i32 : i32 to index
    %c0_60 = arith.constant 0 : index
    %c0_61 = arith.constant 0 : index
    %223 = vector.load %arg2[%222, %c0_60, %c0_61] : memref<8x128x8xf32, #tpu.memory_space<vmem>>, vector<1x128x8xf32>
    %224 = vector.shape_cast %223 : vector<1x128x8xf32> to vector<128x8xf32>
    %c0_62 = arith.constant 0 : index
    %c0_63 = arith.constant 0 : index
    %225 = vector.load %arg3[%c0_62, %c0_63] : memref<128x32xf32, #tpu.memory_space<vmem>>, vector<128x32xf32>
    %cst_64 = arith.constant dense<0.000000e+00> : vector<128x8xf32>
    %226 = tpu.matmul %225, %221, %cst_64 {dimension_numbers = #tpu.dot_dimension_numbers<[1], [0], [0], [1], [0, 0, 1, 1], [], []>} : vector<128x32xf32>, vector<32x8xf32>, vector<128x8xf32> -> vector<128x8xf32>
    %227 = arith.addf %224, %226 : vector<128x8xf32>
    %228 = vector.extract_strided_slice %227 {offsets = [0, 0], sizes = [32, 8], strides = [1, 1]} : vector<128x8xf32> to vector<32x8xf32>
    %229 = arith.negf %228 : vector<32x8xf32>
    %230 = math.exp %229 : vector<32x8xf32>
    %cst_65 = arith.constant 1.000000e+00 : f32
    %231 = vector.broadcast %cst_65 : f32 to vector<32x8xf32>
    %232 = arith.addf %231, %230 : vector<32x8xf32>
    %233 = arith.divf %231, %232 : vector<32x8xf32>
    %234 = vector.extract_strided_slice %227 {offsets = [32, 0], sizes = [32, 8], strides = [1, 1]} : vector<128x8xf32> to vector<32x8xf32>
    %235 = arith.negf %234 : vector<32x8xf32>
    %236 = math.exp %235 : vector<32x8xf32>
    %cst_66 = arith.constant 1.000000e+00 : f32
    %237 = vector.broadcast %cst_66 : f32 to vector<32x8xf32>
    %238 = arith.addf %237, %236 : vector<32x8xf32>
    %239 = arith.divf %237, %238 : vector<32x8xf32>
    %240 = vector.extract_strided_slice %227 {offsets = [64, 0], sizes = [32, 8], strides = [1, 1]} : vector<128x8xf32> to vector<32x8xf32>
    %241 = math.tanh %240 : vector<32x8xf32>
    %242 = vector.extract_strided_slice %227 {offsets = [96, 0], sizes = [32, 8], strides = [1, 1]} : vector<128x8xf32> to vector<32x8xf32>
    %243 = arith.negf %242 : vector<32x8xf32>
    %244 = math.exp %243 : vector<32x8xf32>
    %cst_67 = arith.constant 1.000000e+00 : f32
    %245 = vector.broadcast %cst_67 : f32 to vector<32x8xf32>
    %246 = arith.addf %245, %244 : vector<32x8xf32>
    %247 = arith.divf %245, %246 : vector<32x8xf32>
    %248 = arith.mulf %239, %219 : vector<32x8xf32>
    %249 = arith.mulf %233, %241 : vector<32x8xf32>
    %250 = arith.addf %248, %249 : vector<32x8xf32>
    %251 = math.tanh %250 : vector<32x8xf32>
    %252 = arith.mulf %247, %251 : vector<32x8xf32>
    %c8_i32 = arith.constant 8 : i32
    %c0_68 = arith.constant 0 : index
    %c0_69 = arith.constant 0 : index
    %253 = vector.load %arg7[%c0_68, %c0_69] : memref<32x8xf32, #tpu.memory_space<vmem>>, vector<32x8xf32>
    tpu.vector_store %arg7[%c0_68, %c0_69], %252 {strides = array<i32>} : memref<32x8xf32, #tpu.memory_space<vmem>>, vector<32x8xf32>,
    %c0_70 = arith.constant 0 : index
    %c0_71 = arith.constant 0 : index
    %254 = vector.load %arg8[%c0_70, %c0_71] : memref<32x8xf32, #tpu.memory_space<vmem>>, vector<32x8xf32>
    tpu.vector_store %arg8[%c0_70, %c0_71], %250 {strides = array<i32>} : memref<32x8xf32, #tpu.memory_space<vmem>>, vector<32x8xf32>,
    %c0_i32_72 = arith.constant 0 : i32
    %255 = arith.cmpi eq, %arg1, %c0_i32_72 : i32
    %256 = arith.extui %255 : i1 to i32
    %c0_i32_73 = arith.constant 0 : i32
    %257 = arith.cmpi ne, %256, %c0_i32_73 : i32
    scf.if %257 {
      %c0_74 = arith.constant 0 : index
      %c0_75 = arith.constant 0 : index
      %258 = vector.load %arg4[%c0_74, %c0_75] : memref<32x1xf32, #tpu.memory_space<vmem>>, vector<32x1xf32>
      %259 = vector.broadcast %258 : vector<32x1xf32> to vector<32x8xf32>
      %260 = arith.mulf %252, %259 : vector<32x8xf32>
      %cst_76 = arith.constant dense<0.000000e+00> : vector<8xf32>
      %261 = vector.multi_reduction <add>, %260, %cst_76 [0] : vector<32x8xf32> to vector<8xf32>
      %262 = vector.shape_cast %261 : vector<8xf32> to vector<1x8xf32>
      %c0_77 = arith.constant 0 : index
      %c0_78 = arith.constant 0 : index
      %263 = vector.load %arg5[%c0_77, %c0_78] : memref<1x1xf32, #tpu.memory_space<vmem>>, vector<1x1xf32>
      %264 = vector.broadcast %263 : vector<1x1xf32> to vector<1x8xf32>
      %265 = arith.addf %262, %264 : vector<1x8xf32>
      %266 = vector.shape_cast %265 : vector<1x8xf32> to vector<1x1x8xf32>
      %c0_79 = arith.constant 0 : index
      %c0_80 = arith.constant 0 : index
      %c0_81 = arith.constant 0 : index
      %267 = vector.load %arg6[%c0_79, %c0_80, %c0_81] : memref<1x1x8xf32, #tpu.memory_space<vmem>>, vector<1x1x8xf32>
      tpu.vector_store %arg6[%c0_79, %c0_80, %c0_81], %266 {strides = array<i32>} : memref<1x1x8xf32, #tpu.memory_space<vmem>>, vector<1x1x8xf32>,
    } else {
    }
    return
  }
  func.func @transform_0(%arg0: i32, %arg1: i32) -> (i32, i32, i32) {
    %c0_i32 = arith.constant 0 : i32
    %c0_i32_0 = arith.constant 0 : i32
    return %arg1, %c0_i32, %arg0 : i32, i32, i32
  }
  func.func @transform_1(%arg0: i32, %arg1: i32) -> (i32, i32) {
    %c0_i32 = arith.constant 0 : i32
    %c0_i32_0 = arith.constant 0 : i32
    %c0_i32_1 = arith.constant 0 : i32
    return %c0_i32, %c0_i32_0 : i32, i32
  }
  func.func @transform_2(%arg0: i32, %arg1: i32) -> (i32, i32) {
    %c0_i32 = arith.constant 0 : i32
    %c0_i32_0 = arith.constant 0 : i32
    %c0_i32_1 = arith.constant 0 : i32
    return %c0_i32, %c0_i32_0 : i32, i32
  }
  func.func @transform_3(%arg0: i32, %arg1: i32) -> (i32, i32) {
    %c0_i32 = arith.constant 0 : i32
    %c0_i32_0 = arith.constant 0 : i32
    %c0_i32_1 = arith.constant 0 : i32
    return %c0_i32, %c0_i32_0 : i32, i32
  }
  func.func @transform_4(%arg0: i32, %arg1: i32) -> (i32, i32, i32) {
    %c0_i32 = arith.constant 0 : i32
    %c0_i32_0 = arith.constant 0 : i32
    %c0_i32_1 = arith.constant 0 : i32
    return %arg0, %c0_i32, %c0_i32_0 : i32, i32, i32
  }
}

</mosaic_0001>

<llo_original>
// kernel: shallow_regression_lstm_forward.1
$region0: #{shallow_regression_lstm_forward.1}
  #allocation0 [shape = 'u32[]', space=smem, size = 0x4, offset = 0x4, fixed_abs, tag = 'smem constant byte address 0x4 - core index']
  #allocation1 [shape = 'u32[144,128]{1,0:T(1,128)}', space=vmem, size = 0x12000, scoped, tag = 'internal scratch']
  #allocation2 [shape = 'f32[32,8]{1,0:T(8,128)}', space=vmem, size = 0x4000, scoped, tag = 'scratch operand']
  #allocation3 [shape = 'f32[32,8]{1,0:T(8,128)}', space=vmem, size = 0x4000, scoped, tag = 'scratch operand']
  #allocation4 [shape = 'f32[1,1]{1,0:T(1,128)S(1)}', space=vmem, size = 0x200, scoped, tag = 'scoped memory for shallow_regression_lstm_forward.1']
  %s0 = inlined_call_operand.vmem [shape: f32[8,128,8], index: 0, kind: input, shape index: {}]
  %s1 = inlined_call_operand.vmem [shape: f32[128,32], index: 1, kind: input, shape index: {}]
  %s2 = inlined_call_operand.vmem [shape: f32[32,1], index: 2, kind: input, shape index: {}]
  %s3 = inlined_call_operand.<no memory space> [shape: f32[1,1], index: 3, kind: input, shape index: {}]
  %s4 = inlined_call_operand.vmem [shape: f32[1,1,8], index: 4, kind: output, shape index: {}]
  %s5 = sld [smem:[#allocation0]]
  $region34: #{shallow_regression_lstm_forward.1} parent=0
    _
  %s7 = ssub.s32 1, %s5
  %s8 = scalar_select 0, %s7, %s5
  %v9 = vstv %s3
  %10 = vst [vmem:[#allocation4] sm:$0x1] %v9
  // Predicated region
  $region2: #{shallow_regression_lstm_forward.1} parent=0 // pred_check
    _
  $region3: #{shallow_regression_lstm_forward.1} parent=0 // pred_check_branch
    %12 = sbr.rel (0) target = $region5
  $region4: #{shallow_regression_lstm_forward.1} parent=0 // pred_region
    _
  $region5: #{shallow_regression_lstm_forward.1} parent=0 // pred_fallthru
    _
  // Predicated region
  $region6: #{shallow_regression_lstm_forward.1} parent=0 // pred_check
    _
  $region7: #{shallow_regression_lstm_forward.1} parent=0 // pred_check_branch
    %14 = sbr.rel (0) target = $region9
  $region8: #{shallow_regression_lstm_forward.1} parent=0 // pred_region
    _
  $region9: #{shallow_regression_lstm_forward.1} parent=0 // pred_fallthru
    _
  // Predicated region
  $region10: #{shallow_regression_lstm_forward.1} parent=0 // pred_check
    _
  $region11: #{shallow_regression_lstm_forward.1} parent=0 // pred_check_branch
    %16 = sbr.rel (0) target = $region13
  $region12: #{shallow_regression_lstm_forward.1} parent=0 // pred_region
    _
  $region13: #{shallow_regression_lstm_forward.1} parent=0 // pred_fallthru
    _
  // Predicated region
  $region14: #{shallow_regression_lstm_forward.1} parent=0 // pred_check
    _
  $region15: #{shallow_regression_lstm_forward.1} parent=0 // pred_check_branch
    %18 = sbr.rel (0) target = $region17
  $region16: #{shallow_regression_lstm_forward.1} parent=0 // pred_region
    _
  $region17: #{shallow_regression_lstm_forward.1} parent=0 // pred_fallthru
    _
  %p19 = scmp.eq.s32.totalorder 0, 0
  // Predicated region
  $region18: #{shallow_regression_lstm_forward.1} parent=0 // pred_check
    %p20 = pneg %p19
  $region19: #{shallow_regression_lstm_forward.1} parent=0 // pred_check_branch
    %22 = sbr.rel (%p20) target = $region21
  $region20: #{shallow_regression_lstm_forward.1} parent=0 // pred_region
    %vm23 = vcmask 64512
    %24 = vst.msk [vmem:[#allocation2] sm:$0xff] %vm23, 0.0
    %25 = vst.msk [vmem:[#allocation2 + $0x8] sm:$0xff] %vm23, 0.0
    %26 = vst.msk [vmem:[#allocation2 + $0x10] sm:$0xff] %vm23, 0.0
    %27 = vst.msk [vmem:[#allocation2 + $0x18] sm:$0xff] %vm23, 0.0
    %28 = vst.msk [vmem:[#allocation3] sm:$0xff] %vm23, 0.0
    %29 = vst.msk [vmem:[#allocation3 + $0x8] sm:$0xff] %vm23, 0.0
    %30 = vst.msk [vmem:[#allocation3 + $0x10] sm:$0xff] %vm23, 0.0
    %31 = vst.msk [vmem:[#allocation3 + $0x18] sm:$0xff] %vm23, 0.0
  $region21: #{shallow_regression_lstm_forward.1} parent=0 // pred_fallthru
    _
  %v32 = vld [vmem:[#allocation2] sm:$0xff]
  %v33 = vld [vmem:[#allocation2 + $0x8] sm:$0xff]
  %v34 = vld [vmem:[#allocation2 + $0x10] sm:$0xff]
  %v35 = vld [vmem:[#allocation2 + $0x18] sm:$0xff]
  %v36 = vld [vmem:[#allocation3] sm:$0xff]
  %v37 = vld [vmem:[#allocation3 + $0x8] sm:$0xff]
  %v38 = vld [vmem:[#allocation3 + $0x10] sm:$0xff]
  %v39 = vld [vmem:[#allocation3 + $0x18] sm:$0xff]
  %v40 = vld [vmem:[%s0] sm:$0xff]
  %v41 = vld [vmem:[%s0 + $0x8] sm:$0xff]
  %v42 = vld [vmem:[%s0 + $0x10] sm:$0xff]
  %v43 = vld [vmem:[%s0 + $0x18] sm:$0xff]
  %v44 = vld [vmem:[%s0 + $0x20] sm:$0xff]
  %v45 = vld [vmem:[%s0 + $0x28] sm:$0xff]
  %v46 = vld [vmem:[%s0 + $0x30] sm:$0xff]
  %v47 = vld [vmem:[%s0 + $0x38] sm:$0xff]
  %v48 = vld [vmem:[%s0 + $0x40] sm:$0xff]
  %v49 = vld [vmem:[%s0 + $0x48] sm:$0xff]
  %v50 = vld [vmem:[%s0 + $0x50] sm:$0xff]
  %v51 = vld [vmem:[%s0 + $0x58] sm:$0xff]
  %v52 = vld [vmem:[%s0 + $0x60] sm:$0xff]
  %v53 = vld [vmem:[%s0 + $0x68] sm:$0xff]
  %v54 = vld [vmem:[%s0 + $0x70] sm:$0xff]
  %v55 = vld [vmem:[%s0 + $0x78] sm:$0xff]
  %v56 = vld [vmem:[%s1] sm:$0xff]
  %v57 = vld [vmem:[%s1 + $0x8] sm:$0xff]
  %v58 = vld [vmem:[%s1 + $0x10] sm:$0xff]
  %v59 = vld [vmem:[%s1 + $0x18] sm:$0xff]
  %v60 = vld [vmem:[%s1 + $0x20] sm:$0xff]
  %v61 = vld [vmem:[%s1 + $0x28] sm:$0xff]
  %v62 = vld [vmem:[%s1 + $0x30] sm:$0xff]
  %v63 = vld [vmem:[%s1 + $0x38] sm:$0xff]
  %v64 = vld [vmem:[%s1 + $0x40] sm:$0xff]
  %v65 = vld [vmem:[%s1 + $0x48] sm:$0xff]
  %v66 = vld [vmem:[%s1 + $0x50] sm:$0xff]
  %v67 = vld [vmem:[%s1 + $0x58] sm:$0xff]
  %v68 = vld [vmem:[%s1 + $0x60] sm:$0xff]
  %v69 = vld [vmem:[%s1 + $0x68] sm:$0xff]
  %v70 = vld [vmem:[%s1 + $0x70] sm:$0xff]
  %v71 = vld [vmem:[%s1 + $0x78] sm:$0xff]
  %vm72 = vcmask 261120
  %v74 = vsel %vm72, %v56, 0
  %v77 = vsel %vm72, %v57, 0
  %v80 = vsel %vm72, %v58, 0
  %v83 = vsel %vm72, %v59, 0
  %v86 = vsel %vm72, %v60, 0
  %v89 = vsel %vm72, %v61, 0
  %v92 = vsel %vm72, %v62, 0
  %v95 = vsel %vm72, %v63, 0
  %v98 = vsel %vm72, %v64, 0
  %v101 = vsel %vm72, %v65, 0
  %v104 = vsel %vm72, %v66, 0
  %v107 = vsel %vm72, %v67, 0
  %v110 = vsel %vm72, %v68, 0
  %v113 = vsel %vm72, %v69, 0
  %v116 = vsel %vm72, %v70, 0
  %v119 = vsel %vm72, %v71, 0
  %121 = vmatprep.subr.mxu0 0.0
  %122 = vmatpush1.msra.mxu0 0.0
  %123 = vmatprep.subr.mxu0 0.0
  %124 = vmatpush1.msra.mxu0 0.0
  %125 = vmatprep.subr.mxu0 0.0
  %126 = vmatpush1.msra.mxu0 0.0
  %127 = vmatprep.subr.mxu0 0.0
  %128 = vmatpush1.msra.mxu0 0.0
  %129 = vmatprep.subr.mxu0 0.0
  %130 = vmatpush1.msra.mxu0 0.0
  %131 = vmatprep.subr.mxu0 0.0
  %132 = vmatpush1.msra.mxu0 0.0
  %133 = vmatprep.subr.mxu0 0.0
  %134 = vmatpush1.msra.mxu0 0.0
  %135 = vmatprep.subr.mxu0 0.0
  %136 = vmatpush1.msra.mxu0 0.0
  %137 = vmatprep.subr.mxu0 0.0
  %138 = vmatpush1.msra.mxu0 0.0
  %139 = vmatprep.subr.mxu0 0.0
  %140 = vmatpush1.msra.mxu0 0.0
  %141 = vmatprep.subr.mxu0 0.0
  %142 = vmatpush1.msra.mxu0 0.0
  %143 = vmatprep.subr.mxu0 0.0
  %144 = vmatpush1.msra.mxu0 0.0
  %145 = vmatprep.subr.mxu0 0.0
  %146 = vmatpush1.msra.mxu0 %v35
  %147 = vmatprep.subr.mxu0 0.0
  %148 = vmatpush1.msra.mxu0 %v34
  %149 = vmatprep.subr.mxu0 0.0
  %150 = vmatpush1.msra.mxu0 %v33
  %151 = vmatprep.subr.mxu0 0.0
  %152 = vmatpush1.msra.mxu0 %v32
  %153 = vmatprep.subr.mxu0 0.0
  %154 = vmatpush2.msra.mxu0 0.0
  %155 = vmatprep.subr.mxu0 0.0
  %156 = vmatpush2.msra.mxu0 0.0
  %157 = vmatprep.subr.mxu0 0.0
  %158 = vmatpush2.msra.mxu0 0.0
  %159 = vmatprep.subr.mxu0 0.0
  %160 = vmatpush2.msra.mxu0 0.0
  %161 = vmatprep.subr.mxu0 0.0
  %162 = vmatpush2.msra.mxu0 0.0
  %163 = vmatprep.subr.mxu0 0.0
  %164 = vmatpush2.msra.mxu0 0.0
  %165 = vmatprep.subr.mxu0 0.0
  %166 = vmatpush2.msra.mxu0 0.0
  %167 = vmatprep.subr.mxu0 0.0
  %168 = vmatpush2.msra.mxu0 0.0
  %169 = vmatprep.subr.mxu0 0.0
  %170 = vmatpush2.msra.mxu0 0.0
  %171 = vmatprep.subr.mxu0 0.0
  %172 = vmatpush2.msra.mxu0 0.0
  %173 = vmatprep.subr.mxu0 0.0
  %174 = vmatpush2.msra.mxu0 0.0
  %175 = vmatprep.subr.mxu0 0.0
  %176 = vmatpush2.msra.mxu0 0.0
  %177 = vmatprep.subr.mxu0 0.0
  %178 = vmatpush2.msra.mxu0 0.0
  %179 = vmatprep.subr.mxu0 0.0
  %180 = vmatpush2.msra.mxu0 0.0
  %181 = vmatprep.subr.mxu0 0.0
  %182 = vmatpush2.msra.mxu0 0.0
  %183 = vmatprep.subr.mxu0 0.0
  %184 = vmatpush2.msra.mxu0 0.0
  %185 = vmatprep.mubr.f32.mxu0 0.0
  %186 = vmatmul.mubr.f32.gmra.mxu0 %v74
  %v187 = vpop.f32.mrf.mxu0
  %v188 = vadd.f32 0.0, %v187
  %v189 = vpop.f32.mrf.mxu0
  %190 = vmatprep.mubr.f32.mxu0 0.0
  %191 = vmatmul.mubr.f32.gmra.mxu0 %v77
  %v192 = vpop.f32.mrf.mxu0
  %v193 = vadd.f32 0.0, %v192
  %v194 = vpop.f32.mrf.mxu0
  %195 = vmatprep.mubr.f32.mxu0 0.0
  %196 = vmatmul.mubr.f32.gmra.mxu0 %v80
  %v197 = vpop.f32.mrf.mxu0
  %v198 = vadd.f32 0.0, %v197
  %v199 = vpop.f32.mrf.mxu0
  %200 = vmatprep.mubr.f32.mxu0 0.0
  %201 = vmatmul.mubr.f32.gmra.mxu0 %v83
  %v202 = vpop.f32.mrf.mxu0
  %v203 = vadd.f32 0.0, %v202
  %v204 = vpop.f32.mrf.mxu0
  %205 = vmatprep.mubr.f32.mxu0 0.0
  %206 = vmatmul.mubr.f32.gmra.mxu0 %v86
  %v207 = vpop.f32.mrf.mxu0
  %v208 = vadd.f32 0.0, %v207
  %v209 = vpop.f32.mrf.mxu0
  %210 = vmatprep.mubr.f32.mxu0 0.0
  %211 = vmatmul.mubr.f32.gmra.mxu0 %v89
  %v212 = vpop.f32.mrf.mxu0
  %v213 = vadd.f32 0.0, %v212
  %v214 = vpop.f32.mrf.mxu0
  %215 = vmatprep.mubr.f32.mxu0 0.0
  %216 = vmatmul.mubr.f32.gmra.mxu0 %v92
  %v217 = vpop.f32.mrf.mxu0
  %v218 = vadd.f32 0.0, %v217
  %v219 = vpop.f32.mrf.mxu0
  %220 = vmatprep.mubr.f32.mxu0 0.0
  %221 = vmatmul.mubr.f32.gmra.mxu0 %v95
  %v222 = vpop.f32.mrf.mxu0
  %v223 = vadd.f32 0.0, %v222
  %v224 = vpop.f32.mrf.mxu0
  %225 = vmatprep.mubr.f32.mxu0 0.0
  %226 = vmatmul.mubr.f32.gmra.mxu0 %v98
  %v227 = vpop.f32.mrf.mxu0
  %v228 = vadd.f32 0.0, %v227
  %v229 = vpop.f32.mrf.mxu0
  %230 = vmatprep.mubr.f32.mxu0 0.0
  %231 = vmatmul.mubr.f32.gmra.mxu0 %v101
  %v232 = vpop.f32.mrf.mxu0
  %v233 = vadd.f32 0.0, %v232
  %v234 = vpop.f32.mrf.mxu0
  %235 = vmatprep.mubr.f32.mxu0 0.0
  %236 = vmatmul.mubr.f32.gmra.mxu0 %v104
  %v237 = vpop.f32.mrf.mxu0
  %v238 = vadd.f32 0.0, %v237
  %v239 = vpop.f32.mrf.mxu0
  %240 = vmatprep.mubr.f32.mxu0 0.0
  %241 = vmatmul.mubr.f32.gmra.mxu0 %v107
  %v242 = vpop.f32.mrf.mxu0
  %v243 = vadd.f32 0.0, %v242
  %v244 = vpop.f32.mrf.mxu0
  %245 = vmatprep.mubr.f32.mxu0 0.0
  %246 = vmatmul.mubr.f32.gmra.mxu0 %v110
  %v247 = vpop.f32.mrf.mxu0
  %v248 = vadd.f32 0.0, %v247
  %v249 = vpop.f32.mrf.mxu0
  %250 = vmatprep.mubr.f32.mxu0 0.0
  %251 = vmatmul.mubr.f32.gmra.mxu0 %v113
  %v252 = vpop.f32.mrf.mxu0
  %v253 = vadd.f32 0.0, %v252
  %v254 = vpop.f32.mrf.mxu0
  %255 = vmatprep.mubr.f32.mxu0 0.0
  %256 = vmatmul.mubr.f32.gmra.mxu0 %v116
  %v257 = vpop.f32.mrf.mxu0
  %v258 = vadd.f32 0.0, %v257
  %v259 = vpop.f32.mrf.mxu0
  %260 = vmatprep.mubr.f32.mxu0 0.0
  %261 = vmatmul.mubr.f32.gmra.mxu0 %v119
  %v262 = vpop.f32.mrf.mxu0
  %v263 = vadd.f32 0.0, %v262
  %v264 = vpop.f32.mrf.mxu0
  %265 = vdwg.mxu0
  %v266 = vadd.f32 %v40, %v188
  %v267 = vadd.f32 %v41, %v193
  %v268 = vadd.f32 %v42, %v198
  %v269 = vadd.f32 %v43, %v203
  %v270 = vadd.f32 %v44, %v208
  %v271 = vadd.f32 %v45, %v213
  %v272 = vadd.f32 %v46, %v218
  %v273 = vadd.f32 %v47, %v223
  %v274 = vadd.f32 %v48, %v228
  %v275 = vadd.f32 %v49, %v233
  %v276 = vadd.f32 %v50, %v238
  %v277 = vadd.f32 %v51, %v243
  %v278 = vadd.f32 %v52, %v248
  %v279 = vadd.f32 %v53, %v253
  %v280 = vadd.f32 %v54, %v258
  %v281 = vadd.f32 %v55, %v263
  %v282 = vxor.u32 %v266, 2147483648
  %v283 = vxor.u32 %v267, 2147483648
  %v284 = vxor.u32 %v268, 2147483648
  %v285 = vxor.u32 %v269, 2147483648
  %v286 = vmul.f32 %v282, 1.442695
  %v287 = vpow.pop %v286
  %v288 = vmul.f32 %v283, 1.442695
  %v289 = vpow.pop %v288
  %v290 = vmul.f32 %v284, 1.442695
  %v291 = vpow.pop %v290
  %v292 = vmul.f32 %v285, 1.442695
  %v293 = vpow.pop %v292
  %v294 = vadd.f32 %v287, 1.0
  %v295 = vadd.f32 %v289, 1.0
  %v296 = vadd.f32 %v291, 1.0
  %v297 = vadd.f32 %v293, 1.0
  %v298 = vrcp.pop %v294
  %v299 = vmul.f32 1.0, %v298
  %v300 = vrcp.pop %v295
  %v301 = vmul.f32 1.0, %v300
  %v302 = vrcp.pop %v296
  %v303 = vmul.f32 1.0, %v302
  %v304 = vrcp.pop %v297
  %v305 = vmul.f32 1.0, %v304
  %v306 = vxor.u32 %v270, 2147483648
  %v307 = vxor.u32 %v271, 2147483648
  %v308 = vxor.u32 %v272, 2147483648
  %v309 = vxor.u32 %v273, 2147483648
  %v310 = vmul.f32 %v306, 1.442695
  %v311 = vpow.pop %v310
  %v312 = vmul.f32 %v307, 1.442695
  %v313 = vpow.pop %v312
  %v314 = vmul.f32 %v308, 1.442695
  %v315 = vpow.pop %v314
  %v316 = vmul.f32 %v309, 1.442695
  %v317 = vpow.pop %v316
  %v318 = vadd.f32 %v311, 1.0
  %v319 = vadd.f32 %v313, 1.0
  %v320 = vadd.f32 %v315, 1.0
  %v321 = vadd.f32 %v317, 1.0
  %v322 = vrcp.pop %v318
  %v323 = vmul.f32 1.0, %v322
  %v324 = vrcp.pop %v319
  %v325 = vmul.f32 1.0, %v324
  %v326 = vrcp.pop %v320
  %v327 = vmul.f32 1.0, %v326
  %v328 = vrcp.pop %v321
  %v329 = vmul.f32 1.0, %v328
  %v330 = vtanh.pop %v274
  %v331 = vtanh.pop %v275
  %v332 = vtanh.pop %v276
  %v333 = vtanh.pop %v277
  %v334 = vxor.u32 %v278, 2147483648
  %v335 = vxor.u32 %v279, 2147483648
  %v336 = vxor.u32 %v280, 2147483648
  %v337 = vxor.u32 %v281, 2147483648
  %v338 = vmul.f32 %v334, 1.442695
  %v339 = vpow.pop %v338
  %v340 = vmul.f32 %v335, 1.442695
  %v341 = vpow.pop %v340
  %v342 = vmul.f32 %v336, 1.442695
  %v343 = vpow.pop %v342
  %v344 = vmul.f32 %v337, 1.442695
  %v345 = vpow.pop %v344
  %v346 = vadd.f32 %v339, 1.0
  %v347 = vadd.f32 %v341, 1.0
  %v348 = vadd.f32 %v343, 1.0
  %v349 = vadd.f32 %v345, 1.0
  %v350 = vrcp.pop %v346
  %v351 = vmul.f32 1.0, %v350
  %v352 = vrcp.pop %v347
  %v353 = vmul.f32 1.0, %v352
  %v354 = vrcp.pop %v348
  %v355 = vmul.f32 1.0, %v354
  %v356 = vrcp.pop %v349
  %v357 = vmul.f32 1.0, %v356
  %v358 = vmul.f32 %v323, %v36
  %v359 = vmul.f32 %v325, %v37
  %v360 = vmul.f32 %v327, %v38
  %v361 = vmul.f32 %v329, %v39
  %v362 = vmul.f32 %v299, %v330
  %v363 = vmul.f32 %v301, %v331
  %v364 = vmul.f32 %v303, %v332
  %v365 = vmul.f32 %v305, %v333
  %v366 = vadd.f32 %v358, %v362
  %v367 = vadd.f32 %v359, %v363
  %v368 = vadd.f32 %v360, %v364
  %v369 = vadd.f32 %v361, %v365
  %v370 = vtanh.pop %v366
  %v371 = vtanh.pop %v367
  %v372 = vtanh.pop %v368
  %v373 = vtanh.pop %v369
  %v374 = vmul.f32 %v351, %v370
  %v375 = vmul.f32 %v353, %v371
  %v376 = vmul.f32 %v355, %v372
  %v377 = vmul.f32 %v357, %v373
  %s378 = scalar_lea.vmem %s0, 128
  %v379 = vld [vmem:[%s378] sm:$0xff]
  %v380 = vld [vmem:[%s378 + $0x8] sm:$0xff]
  %v381 = vld [vmem:[%s378 + $0x10] sm:$0xff]
  %v382 = vld [vmem:[%s378 + $0x18] sm:$0xff]
  %v383 = vld [vmem:[%s378 + $0x20] sm:$0xff]
  %v384 = vld [vmem:[%s378 + $0x28] sm:$0xff]
  %v385 = vld [vmem:[%s378 + $0x30] sm:$0xff]
  %v386 = vld [vmem:[%s378 + $0x38] sm:$0xff]
  %v387 = vld [vmem:[%s378 + $0x40] sm:$0xff]
  %v388 = vld [vmem:[%s378 + $0x48] sm:$0xff]
  %v389 = vld [vmem:[%s378 + $0x50] sm:$0xff]
  %v390 = vld [vmem:[%s378 + $0x58] sm:$0xff]
  %v391 = vld [vmem:[%s378 + $0x60] sm:$0xff]
  %v392 = vld [vmem:[%s378 + $0x68] sm:$0xff]
  %v393 = vld [vmem:[%s378 + $0x70] sm:$0xff]
  %v394 = vld [vmem:[%s378 + $0x78] sm:$0xff]
  %395 = vmatprep.subr.mxu0 0.0
  %396 = vmatpush1.msra.mxu0 0.0
  %397 = vmatprep.subr.mxu0 0.0
  %398 = vmatpush1.msra.mxu0 0.0
  %399 = vmatprep.subr.mxu0 0.0
  %400 = vmatpush1.msra.mxu0 0.0
  %401 = vmatprep.subr.mxu0 0.0
  %402 = vmatpush1.msra.mxu0 0.0
  %403 = vmatprep.subr.mxu0 0.0
  %404 = vmatpush1.msra.mxu0 0.0
  %405 = vmatprep.subr.mxu0 0.0
  %406 = vmatpush1.msra.mxu0 0.0
  %407 = vmatprep.subr.mxu0 0.0
  %408 = vmatpush1.msra.mxu0 0.0
  %409 = vmatprep.subr.mxu0 0.0
  %410 = vmatpush1.msra.mxu0 0.0
  %411 = vmatprep.subr.mxu0 0.0
  %412 = vmatpush1.msra.mxu0 0.0
  %413 = vmatprep.subr.mxu0 0.0
  %414 = vmatpush1.msra.mxu0 0.0
  %415 = vmatprep.subr.mxu0 0.0
  %416 = vmatpush1.msra.mxu0 0.0
  %417 = vmatprep.subr.mxu0 0.0
  %418 = vmatpush1.msra.mxu0 0.0
  %419 = vmatprep.subr.mxu0 0.0
  %420 = vmatpush1.msra.mxu0 %v377
  %421 = vmatprep.subr.mxu0 0.0
  %422 = vmatpush1.msra.mxu0 %v376
  %423 = vmatprep.subr.mxu0 0.0
  %424 = vmatpush1.msra.mxu0 %v375
  %425 = vmatprep.subr.mxu0 0.0
  %426 = vmatpush1.msra.mxu0 %v374
  %427 = vmatprep.subr.mxu0 0.0
  %428 = vmatpush2.msra.mxu0 0.0
  %429 = vmatprep.subr.mxu0 0.0
  %430 = vmatpush2.msra.mxu0 0.0
  %431 = vmatprep.subr.mxu0 0.0
  %432 = vmatpush2.msra.mxu0 0.0
  %433 = vmatprep.subr.mxu0 0.0
  %434 = vmatpush2.msra.mxu0 0.0
  %435 = vmatprep.subr.mxu0 0.0
  %436 = vmatpush2.msra.mxu0 0.0
  %437 = vmatprep.subr.mxu0 0.0
  %438 = vmatpush2.msra.mxu0 0.0
  %439 = vmatprep.subr.mxu0 0.0
  %440 = vmatpush2.msra.mxu0 0.0
  %441 = vmatprep.subr.mxu0 0.0
  %442 = vmatpush2.msra.mxu0 0.0
  %443 = vmatprep.subr.mxu0 0.0
  %444 = vmatpush2.msra.mxu0 0.0
  %445 = vmatprep.subr.mxu0 0.0
  %446 = vmatpush2.msra.mxu0 0.0
  %447 = vmatprep.subr.mxu0 0.0
  %448 = vmatpush2.msra.mxu0 0.0
  %449 = vmatprep.subr.mxu0 0.0
  %450 = vmatpush2.msra.mxu0 0.0
  %451 = vmatprep.subr.mxu0 0.0
  %452 = vmatpush2.msra.mxu0 0.0
  %453 = vmatprep.subr.mxu0 0.0
  %454 = vmatpush2.msra.mxu0 0.0
  %455 = vmatprep.subr.mxu0 0.0
  %456 = vmatpush2.msra.mxu0 0.0
  %457 = vmatprep.subr.mxu0 0.0
  %458 = vmatpush2.msra.mxu0 0.0
  %459 = vmatprep.mubr.f32.mxu0 0.0
  %460 = vmatmul.mubr.f32.gmra.mxu0 %v74
  %v461 = vpop.f32.mrf.mxu0
  %v462 = vadd.f32 0.0, %v461
  %v463 = vpop.f32.mrf.mxu0
  %464 = vmatprep.mubr.f32.mxu0 0.0
  %465 = vmatmul.mubr.f32.gmra.mxu0 %v77
  %v466 = vpop.f32.mrf.mxu0
  %v467 = vadd.f32 0.0, %v466
  %v468 = vpop.f32.mrf.mxu0
  %469 = vmatprep.mubr.f32.mxu0 0.0
  %470 = vmatmul.mubr.f32.gmra.mxu0 %v80
  %v471 = vpop.f32.mrf.mxu0
  %v472 = vadd.f32 0.0, %v471
  %v473 = vpop.f32.mrf.mxu0
  %474 = vmatprep.mubr.f32.mxu0 0.0
  %475 = vmatmul.mubr.f32.gmra.mxu0 %v83
  %v476 = vpop.f32.mrf.mxu0
  %v477 = vadd.f32 0.0, %v476
  %v478 = vpop.f32.mrf.mxu0
  %479 = vmatprep.mubr.f32.mxu0 0.0
  %480 = vmatmul.mubr.f32.gmra.mxu0 %v86
  %v481 = vpop.f32.mrf.mxu0
  %v482 = vadd.f32 0.0, %v481
  %v483 = vpop.f32.mrf.mxu0
  %484 = vmatprep.mubr.f32.mxu0 0.0
  %485 = vmatmul.mubr.f32.gmra.mxu0 %v89
  %v486 = vpop.f32.mrf.mxu0
  %v487 = vadd.f32 0.0, %v486
  %v488 = vpop.f32.mrf.mxu0
  %489 = vmatprep.mubr.f32.mxu0 0.0
  %490 = vmatmul.mubr.f32.gmra.mxu0 %v92
  %v491 = vpop.f32.mrf.mxu0
  %v492 = vadd.f32 0.0, %v491
  %v493 = vpop.f32.mrf.mxu0
  %494 = vmatprep.mubr.f32.mxu0 0.0
  %495 = vmatmul.mubr.f32.gmra.mxu0 %v95
  %v496 = vpop.f32.mrf.mxu0
  %v497 = vadd.f32 0.0, %v496
  %v498 = vpop.f32.mrf.mxu0
  %499 = vmatprep.mubr.f32.mxu0 0.0
  %500 = vmatmul.mubr.f32.gmra.mxu0 %v98
  %v501 = vpop.f32.mrf.mxu0
  %v502 = vadd.f32 0.0, %v501
  %v503 = vpop.f32.mrf.mxu0
  %504 = vmatprep.mubr.f32.mxu0 0.0
  %505 = vmatmul.mubr.f32.gmra.mxu0 %v101
  %v506 = vpop.f32.mrf.mxu0
  %v507 = vadd.f32 0.0, %v506
  %v508 = vpop.f32.mrf.mxu0
  %509 = vmatprep.mubr.f32.mxu0 0.0
  %510 = vmatmul.mubr.f32.gmra.mxu0 %v104
  %v511 = vpop.f32.mrf.mxu0
  %v512 = vadd.f32 0.0, %v511
  %v513 = vpop.f32.mrf.mxu0
  %514 = vmatprep.mubr.f32.mxu0 0.0
  %515 = vmatmul.mubr.f32.gmra.mxu0 %v107
  %v516 = vpop.f32.mrf.mxu0
  %v517 = vadd.f32 0.0, %v516
  %v518 = vpop.f32.mrf.mxu0
  %519 = vmatprep.mubr.f32.mxu0 0.0
  %520 = vmatmul.mubr.f32.gmra.mxu0 %v110
  %v521 = vpop.f32.mrf.mxu0
  %v522 = vadd.f32 0.0, %v521
  %v523 = vpop.f32.mrf.mxu0
  %524 = vmatprep.mubr.f32.mxu0 0.0
  %525 = vmatmul.mubr.f32.gmra.mxu0 %v113
  %v526 = vpop.f32.mrf.mxu0
  %v527 = vadd.f32 0.0, %v526
  %v528 = vpop.f32.mrf.mxu0
  %529 = vmatprep.mubr.f32.mxu0 0.0
  %530 = vmatmul.mubr.f32.gmra.mxu0 %v116
  %v531 = vpop.f32.mrf.mxu0
  %v532 = vadd.f32 0.0, %v531
  %v533 = vpop.f32.mrf.mxu0
  %534 = vmatprep.mubr.f32.mxu0 0.0
  %535 = vmatmul.mubr.f32.gmra.mxu0 %v119
  %v536 = vpop.f32.mrf.mxu0
  %v537 = vadd.f32 0.0, %v536
  %v538 = vpop.f32.mrf.mxu0
  %539 = vdwg.mxu0
  %v540 = vadd.f32 %v379, %v462
  %v541 = vadd.f32 %v380, %v467
  %v542 = vadd.f32 %v381, %v472
  %v543 = vadd.f32 %v382, %v477
  %v544 = vadd.f32 %v383, %v482
  %v545 = vadd.f32 %v384, %v487
  %v546 = vadd.f32 %v385, %v492
  %v547 = vadd.f32 %v386, %v497
  %v548 = vadd.f32 %v387, %v502
  %v549 = vadd.f32 %v388, %v507
  %v550 = vadd.f32 %v389, %v512
  %v551 = vadd.f32 %v390, %v517
  %v552 = vadd.f32 %v391, %v522
  %v553 = vadd.f32 %v392, %v527
  %v554 = vadd.f32 %v393, %v532
  %v555 = vadd.f32 %v394, %v537
  %v556 = vxor.u32 %v540, 2147483648
  %v557 = vxor.u32 %v541, 2147483648
  %v558 = vxor.u32 %v542, 2147483648
  %v559 = vxor.u32 %v543, 2147483648
  %v560 = vmul.f32 %v556, 1.442695
  %v561 = vpow.pop %v560
  %v562 = vmul.f32 %v557, 1.442695
  %v563 = vpow.pop %v562
  %v564 = vmul.f32 %v558, 1.442695
  %v565 = vpow.pop %v564
  %v566 = vmul.f32 %v559, 1.442695
  %v567 = vpow.pop %v566
  %v568 = vadd.f32 %v561, 1.0
  %v569 = vadd.f32 %v563, 1.0
  %v570 = vadd.f32 %v565, 1.0
  %v571 = vadd.f32 %v567, 1.0
  %v572 = vrcp.pop %v568
  %v573 = vmul.f32 1.0, %v572
  %v574 = vrcp.pop %v569
  %v575 = vmul.f32 1.0, %v574
  %v576 = vrcp.pop %v570
  %v577 = vmul.f32 1.0, %v576
  %v578 = vrcp.pop %v571
  %v579 = vmul.f32 1.0, %v578
  %v580 = vxor.u32 %v544, 2147483648
  %v581 = vxor.u32 %v545, 2147483648
  %v582 = vxor.u32 %v546, 2147483648
  %v583 = vxor.u32 %v547, 2147483648
  %v584 = vmul.f32 %v580, 1.442695
  %v585 = vpow.pop %v584
  %v586 = vmul.f32 %v581, 1.442695
  %v587 = vpow.pop %v586
  %v588 = vmul.f32 %v582, 1.442695
  %v589 = vpow.pop %v588
  %v590 = vmul.f32 %v583, 1.442695
  %v591 = vpow.pop %v590
  %v592 = vadd.f32 %v585, 1.0
  %v593 = vadd.f32 %v587, 1.0
  %v594 = vadd.f32 %v589, 1.0
  %v595 = vadd.f32 %v591, 1.0
  %v596 = vrcp.pop %v592
  %v597 = vmul.f32 1.0, %v596
  %v598 = vrcp.pop %v593
  %v599 = vmul.f32 1.0, %v598
  %v600 = vrcp.pop %v594
  %v601 = vmul.f32 1.0, %v600
  %v602 = vrcp.pop %v595
  %v603 = vmul.f32 1.0, %v602
  %v604 = vtanh.pop %v548
  %v605 = vtanh.pop %v549
  %v606 = vtanh.pop %v550
  %v607 = vtanh.pop %v551
  %v608 = vxor.u32 %v552, 2147483648
  %v609 = vxor.u32 %v553, 2147483648
  %v610 = vxor.u32 %v554, 2147483648
  %v611 = vxor.u32 %v555, 2147483648
  %v612 = vmul.f32 %v608, 1.442695
  %v613 = vpow.pop %v612
  %v614 = vmul.f32 %v609, 1.442695
  %v615 = vpow.pop %v614
  %v616 = vmul.f32 %v610, 1.442695
  %v617 = vpow.pop %v616
  %v618 = vmul.f32 %v611, 1.442695
  %v619 = vpow.pop %v618
  %v620 = vadd.f32 %v613, 1.0
  %v621 = vadd.f32 %v615, 1.0
  %v622 = vadd.f32 %v617, 1.0
  %v623 = vadd.f32 %v619, 1.0
  %v624 = vrcp.pop %v620
  %v625 = vmul.f32 1.0, %v624
  %v626 = vrcp.pop %v621
  %v627 = vmul.f32 1.0, %v626
  %v628 = vrcp.pop %v622
  %v629 = vmul.f32 1.0, %v628
  %v630 = vrcp.pop %v623
  %v631 = vmul.f32 1.0, %v630
  %v632 = vmul.f32 %v597, %v366
  %v633 = vmul.f32 %v599, %v367
  %v634 = vmul.f32 %v601, %v368
  %v635 = vmul.f32 %v603, %v369
  %v636 = vmul.f32 %v573, %v604
  %v637 = vmul.f32 %v575, %v605
  %v638 = vmul.f32 %v577, %v606
  %v639 = vmul.f32 %v579, %v607
  %v640 = vadd.f32 %v632, %v636
  %v641 = vadd.f32 %v633, %v637
  %v642 = vadd.f32 %v634, %v638
  %v643 = vadd.f32 %v635, %v639
  %v644 = vtanh.pop %v640
  %v645 = vtanh.pop %v641
  %v646 = vtanh.pop %v642
  %v647 = vtanh.pop %v643
  %v648 = vmul.f32 %v625, %v644
  %v649 = vmul.f32 %v627, %v645
  %v650 = vmul.f32 %v629, %v646
  %v651 = vmul.f32 %v631, %v647
  %s652 = scalar_lea.vmem %s0, 256
  %v653 = vld [vmem:[%s652] sm:$0xff]
  %v654 = vld [vmem:[%s652 + $0x8] sm:$0xff]
  %v655 = vld [vmem:[%s652 + $0x10] sm:$0xff]
  %v656 = vld [vmem:[%s652 + $0x18] sm:$0xff]
  %v657 = vld [vmem:[%s652 + $0x20] sm:$0xff]
  %v658 = vld [vmem:[%s652 + $0x28] sm:$0xff]
  %v659 = vld [vmem:[%s652 + $0x30] sm:$0xff]
  %v660 = vld [vmem:[%s652 + $0x38] sm:$0xff]
  %v661 = vld [vmem:[%s652 + $0x40] sm:$0xff]
  %v662 = vld [vmem:[%s652 + $0x48] sm:$0xff]
  %v663 = vld [vmem:[%s652 + $0x50] sm:$0xff]
  %v664 = vld [vmem:[%s652 + $0x58] sm:$0xff]
  %v665 = vld [vmem:[%s652 + $0x60] sm:$0xff]
  %v666 = vld [vmem:[%s652 + $0x68] sm:$0xff]
  %v667 = vld [vmem:[%s652 + $0x70] sm:$0xff]
  %v668 = vld [vmem:[%s652 + $0x78] sm:$0xff]
  %669 = vmatprep.subr.mxu0 0.0
  %670 = vmatpush1.msra.mxu0 0.0
  %671 = vmatprep.subr.mxu0 0.0
  %672 = vmatpush1.msra.mxu0 0.0
  %673 = vmatprep.subr.mxu0 0.0
  %674 = vmatpush1.msra.mxu0 0.0
  %675 = vmatprep.subr.mxu0 0.0
  %676 = vmatpush1.msra.mxu0 0.0
  %677 = vmatprep.subr.mxu0 0.0
  %678 = vmatpush1.msra.mxu0 0.0
  %679 = vmatprep.subr.mxu0 0.0
  %680 = vmatpush1.msra.mxu0 0.0
  %681 = vmatprep.subr.mxu0 0.0
  %682 = vmatpush1.msra.mxu0 0.0
  %683 = vmatprep.subr.mxu0 0.0
  %684 = vmatpush1.msra.mxu0 0.0
  %685 = vmatprep.subr.mxu0 0.0
  %686 = vmatpush1.msra.mxu0 0.0
  %687 = vmatprep.subr.mxu0 0.0
  %688 = vmatpush1.msra.mxu0 0.0
  %689 = vmatprep.subr.mxu0 0.0
  %690 = vmatpush1.msra.mxu0 0.0
  %691 = vmatprep.subr.mxu0 0.0
  %692 = vmatpush1.msra.mxu0 0.0
  %693 = vmatprep.subr.mxu0 0.0
  %694 = vmatpush1.msra.mxu0 %v651
  %695 = vmatprep.subr.mxu0 0.0
  %696 = vmatpush1.msra.mxu0 %v650
  %697 = vmatprep.subr.mxu0 0.0
  %698 = vmatpush1.msra.mxu0 %v649
  %699 = vmatprep.subr.mxu0 0.0
  %700 = vmatpush1.msra.mxu0 %v648
  %701 = vmatprep.subr.mxu0 0.0
  %702 = vmatpush2.msra.mxu0 0.0
  %703 = vmatprep.subr.mxu0 0.0
  %704 = vmatpush2.msra.mxu0 0.0
  %705 = vmatprep.subr.mxu0 0.0
  %706 = vmatpush2.msra.mxu0 0.0
  %707 = vmatprep.subr.mxu0 0.0
  %708 = vmatpush2.msra.mxu0 0.0
  %709 = vmatprep.subr.mxu0 0.0
  %710 = vmatpush2.msra.mxu0 0.0
  %711 = vmatprep.subr.mxu0 0.0
  %712 = vmatpush2.msra.mxu0 0.0
  %713 = vmatprep.subr.mxu0 0.0
  %714 = vmatpush2.msra.mxu0 0.0
  %715 = vmatprep.subr.mxu0 0.0
  %716 = vmatpush2.msra.mxu0 0.0
  %717 = vmatprep.subr.mxu0 0.0
  %718 = vmatpush2.msra.mxu0 0.0
  %719 = vmatprep.subr.mxu0 0.0
  %720 = vmatpush2.msra.mxu0 0.0
  %721 = vmatprep.subr.mxu0 0.0
  %722 = vmatpush2.msra.mxu0 0.0
  %723 = vmatprep.subr.mxu0 0.0
  %724 = vmatpush2.msra.mxu0 0.0
  %725 = vmatprep.subr.mxu0 0.0
  %726 = vmatpush2.msra.mxu0 0.0
  %727 = vmatprep.subr.mxu0 0.0
  %728 = vmatpush2.msra.mxu0 0.0
  %729 = vmatprep.subr.mxu0 0.0
  %730 = vmatpush2.msra.mxu0 0.0
  %731 = vmatprep.subr.mxu0 0.0
  %732 = vmatpush2.msra.mxu0 0.0
  %733 = vmatprep.mubr.f32.mxu0 0.0
  %734 = vmatmul.mubr.f32.gmra.mxu0 %v74
  %v735 = vpop.f32.mrf.mxu0
  %v736 = vadd.f32 0.0, %v735
  %v737 = vpop.f32.mrf.mxu0
  %738 = vmatprep.mubr.f32.mxu0 0.0
  %739 = vmatmul.mubr.f32.gmra.mxu0 %v77
  %v740 = vpop.f32.mrf.mxu0
  %v741 = vadd.f32 0.0, %v740
  %v742 = vpop.f32.mrf.mxu0
  %743 = vmatprep.mubr.f32.mxu0 0.0
  %744 = vmatmul.mubr.f32.gmra.mxu0 %v80
  %v745 = vpop.f32.mrf.mxu0
  %v746 = vadd.f32 0.0, %v745
  %v747 = vpop.f32.mrf.mxu0
  %748 = vmatprep.mubr.f32.mxu0 0.0
  %749 = vmatmul.mubr.f32.gmra.mxu0 %v83
  %v750 = vpop.f32.mrf.mxu0
  %v751 = vadd.f32 0.0, %v750
  %v752 = vpop.f32.mrf.mxu0
  %753 = vmatprep.mubr.f32.mxu0 0.0
  %754 = vmatmul.mubr.f32.gmra.mxu0 %v86
  %v755 = vpop.f32.mrf.mxu0
  %v756 = vadd.f32 0.0, %v755
  %v757 = vpop.f32.mrf.mxu0
  %758 = vmatprep.mubr.f32.mxu0 0.0
  %759 = vmatmul.mubr.f32.gmra.mxu0 %v89
  %v760 = vpop.f32.mrf.mxu0
  %v761 = vadd.f32 0.0, %v760
  %v762 = vpop.f32.mrf.mxu0
  %763 = vmatprep.mubr.f32.mxu0 0.0
  %764 = vmatmul.mubr.f32.gmra.mxu0 %v92
  %v765 = vpop.f32.mrf.mxu0
  %v766 = vadd.f32 0.0, %v765
  %v767 = vpop.f32.mrf.mxu0
  %768 = vmatprep.mubr.f32.mxu0 0.0
  %769 = vmatmul.mubr.f32.gmra.mxu0 %v95
  %v770 = vpop.f32.mrf.mxu0
  %v771 = vadd.f32 0.0, %v770
  %v772 = vpop.f32.mrf.mxu0
  %773 = vmatprep.mubr.f32.mxu0 0.0
  %774 = vmatmul.mubr.f32.gmra.mxu0 %v98
  %v775 = vpop.f32.mrf.mxu0
  %v776 = vadd.f32 0.0, %v775
  %v777 = vpop.f32.mrf.mxu0
  %778 = vmatprep.mubr.f32.mxu0 0.0
  %779 = vmatmul.mubr.f32.gmra.mxu0 %v101
  %v780 = vpop.f32.mrf.mxu0
  %v781 = vadd.f32 0.0, %v780
  %v782 = vpop.f32.mrf.mxu0
  %783 = vmatprep.mubr.f32.mxu0 0.0
  %784 = vmatmul.mubr.f32.gmra.mxu0 %v104
  %v785 = vpop.f32.mrf.mxu0
  %v786 = vadd.f32 0.0, %v785
  %v787 = vpop.f32.mrf.mxu0
  %788 = vmatprep.mubr.f32.mxu0 0.0
  %789 = vmatmul.mubr.f32.gmra.mxu0 %v107
  %v790 = vpop.f32.mrf.mxu0
  %v791 = vadd.f32 0.0, %v790
  %v792 = vpop.f32.mrf.mxu0
  %793 = vmatprep.mubr.f32.mxu0 0.0
  %794 = vmatmul.mubr.f32.gmra.mxu0 %v110
  %v795 = vpop.f32.mrf.mxu0
  %v796 = vadd.f32 0.0, %v795
  %v797 = vpop.f32.mrf.mxu0
  %798 = vmatprep.mubr.f32.mxu0 0.0
  %799 = vmatmul.mubr.f32.gmra.mxu0 %v113
  %v800 = vpop.f32.mrf.mxu0
  %v801 = vadd.f32 0.0, %v800
  %v802 = vpop.f32.mrf.mxu0
  %803 = vmatprep.mubr.f32.mxu0 0.0
  %804 = vmatmul.mubr.f32.gmra.mxu0 %v116
  %v805 = vpop.f32.mrf.mxu0
  %v806 = vadd.f32 0.0, %v805
  %v807 = vpop.f32.mrf.mxu0
  %808 = vmatprep.mubr.f32.mxu0 0.0
  %809 = vmatmul.mubr.f32.gmra.mxu0 %v119
  %v810 = vpop.f32.mrf.mxu0
  %v811 = vadd.f32 0.0, %v810
  %v812 = vpop.f32.mrf.mxu0
  %813 = vdwg.mxu0
  %v814 = vadd.f32 %v653, %v736
  %v815 = vadd.f32 %v654, %v741
  %v816 = vadd.f32 %v655, %v746
  %v817 = vadd.f32 %v656, %v751
  %v818 = vadd.f32 %v657, %v756
  %v819 = vadd.f32 %v658, %v761
  %v820 = vadd.f32 %v659, %v766
  %v821 = vadd.f32 %v660, %v771
  %v822 = vadd.f32 %v661, %v776
  %v823 = vadd.f32 %v662, %v781
  %v824 = vadd.f32 %v663, %v786
  %v825 = vadd.f32 %v664, %v791
  %v826 = vadd.f32 %v665, %v796
  %v827 = vadd.f32 %v666, %v801
  %v828 = vadd.f32 %v667, %v806
  %v829 = vadd.f32 %v668, %v811
  %v830 = vxor.u32 %v814, 2147483648
  %v831 = vxor.u32 %v815, 2147483648
  %v832 = vxor.u32 %v816, 2147483648
  %v833 = vxor.u32 %v817, 2147483648
  %v834 = vmul.f32 %v830, 1.442695
  %v835 = vpow.pop %v834
  %v836 = vmul.f32 %v831, 1.442695
  %v837 = vpow.pop %v836
  %v838 = vmul.f32 %v832, 1.442695
  %v839 = vpow.pop %v838
  %v840 = vmul.f32 %v833, 1.442695
  %v841 = vpow.pop %v840
  %v842 = vadd.f32 %v835, 1.0
  %v843 = vadd.f32 %v837, 1.0
  %v844 = vadd.f32 %v839, 1.0
  %v845 = vadd.f32 %v841, 1.0
  %v846 = vrcp.pop %v842
  %v847 = vmul.f32 1.0, %v846
  %v848 = vrcp.pop %v843
  %v849 = vmul.f32 1.0, %v848
  %v850 = vrcp.pop %v844
  %v851 = vmul.f32 1.0, %v850
  %v852 = vrcp.pop %v845
  %v853 = vmul.f32 1.0, %v852
  %v854 = vxor.u32 %v818, 2147483648
  %v855 = vxor.u32 %v819, 2147483648
  %v856 = vxor.u32 %v820, 2147483648
  %v857 = vxor.u32 %v821, 2147483648
  %v858 = vmul.f32 %v854, 1.442695
  %v859 = vpow.pop %v858
  %v860 = vmul.f32 %v855, 1.442695
  %v861 = vpow.pop %v860
  %v862 = vmul.f32 %v856, 1.442695
  %v863 = vpow.pop %v862
  %v864 = vmul.f32 %v857, 1.442695
  %v865 = vpow.pop %v864
  %v866 = vadd.f32 %v859, 1.0
  %v867 = vadd.f32 %v861, 1.0
  %v868 = vadd.f32 %v863, 1.0
  %v869 = vadd.f32 %v865, 1.0
  %v870 = vrcp.pop %v866
  %v871 = vmul.f32 1.0, %v870
  %v872 = vrcp.pop %v867
  %v873 = vmul.f32 1.0, %v872
  %v874 = vrcp.pop %v868
  %v875 = vmul.f32 1.0, %v874
  %v876 = vrcp.pop %v869
  %v877 = vmul.f32 1.0, %v876
  %v878 = vtanh.pop %v822
  %v879 = vtanh.pop %v823
  %v880 = vtanh.pop %v824
  %v881 = vtanh.pop %v825
  %v882 = vxor.u32 %v826, 2147483648
  %v883 = vxor.u32 %v827, 2147483648
  %v884 = vxor.u32 %v828, 2147483648
  %v885 = vxor.u32 %v829, 2147483648
  %v886 = vmul.f32 %v882, 1.442695
  %v887 = vpow.pop %v886
  %v888 = vmul.f32 %v883, 1.442695
  %v889 = vpow.pop %v888
  %v890 = vmul.f32 %v884, 1.442695
  %v891 = vpow.pop %v890
  %v892 = vmul.f32 %v885, 1.442695
  %v893 = vpow.pop %v892
  %v894 = vadd.f32 %v887, 1.0
  %v895 = vadd.f32 %v889, 1.0
  %v896 = vadd.f32 %v891, 1.0
  %v897 = vadd.f32 %v893, 1.0
  %v898 = vrcp.pop %v894
  %v899 = vmul.f32 1.0, %v898
  %v900 = vrcp.pop %v895
  %v901 = vmul.f32 1.0, %v900
  %v902 = vrcp.pop %v896
  %v903 = vmul.f32 1.0, %v902
  %v904 = vrcp.pop %v897
  %v905 = vmul.f32 1.0, %v904
  %v906 = vmul.f32 %v871, %v640
  %v907 = vmul.f32 %v873, %v641
  %v908 = vmul.f32 %v875, %v642
  %v909 = vmul.f32 %v877, %v643
  %v910 = vmul.f32 %v847, %v878
  %v911 = vmul.f32 %v849, %v879
  %v912 = vmul.f32 %v851, %v880
  %v913 = vmul.f32 %v853, %v881
  %v914 = vadd.f32 %v906, %v910
  %v915 = vadd.f32 %v907, %v911
  %v916 = vadd.f32 %v908, %v912
  %v917 = vadd.f32 %v909, %v913
  %v918 = vtanh.pop %v914
  %v919 = vtanh.pop %v915
  %v920 = vtanh.pop %v916
  %v921 = vtanh.pop %v917
  %v922 = vmul.f32 %v899, %v918
  %v923 = vmul.f32 %v901, %v919
  %v924 = vmul.f32 %v903, %v920
  %v925 = vmul.f32 %v905, %v921
  %s926 = scalar_lea.vmem %s0, 384
  %v927 = vld [vmem:[%s926] sm:$0xff]
  %v928 = vld [vmem:[%s926 + $0x8] sm:$0xff]
  %v929 = vld [vmem:[%s926 + $0x10] sm:$0xff]
  %v930 = vld [vmem:[%s926 + $0x18] sm:$0xff]
  %v931 = vld [vmem:[%s926 + $0x20] sm:$0xff]
  %v932 = vld [vmem:[%s926 + $0x28] sm:$0xff]
  %v933 = vld [vmem:[%s926 + $0x30] sm:$0xff]
  %v934 = vld [vmem:[%s926 + $0x38] sm:$0xff]
  %v935 = vld [vmem:[%s926 + $0x40] sm:$0xff]
  %v936 = vld [vmem:[%s926 + $0x48] sm:$0xff]
  %v937 = vld [vmem:[%s926 + $0x50] sm:$0xff]
  %v938 = vld [vmem:[%s926 + $0x58] sm:$0xff]
  %v939 = vld [vmem:[%s926 + $0x60] sm:$0xff]
  %v940 = vld [vmem:[%s926 + $0x68] sm:$0xff]
  %v941 = vld [vmem:[%s926 + $0x70] sm:$0xff]
  %v942 = vld [vmem:[%s926 + $0x78] sm:$0xff]
  %943 = vmatprep.subr.mxu0 0.0
  %944 = vmatpush1.msra.mxu0 0.0
  %945 = vmatprep.subr.mxu0 0.0
  %946 = vmatpush1.msra.mxu0 0.0
  %947 = vmatprep.subr.mxu0 0.0
  %948 = vmatpush1.msra.mxu0 0.0
  %949 = vmatprep.subr.mxu0 0.0
  %950 = vmatpush1.msra.mxu0 0.0
  %951 = vmatprep.subr.mxu0 0.0
  %952 = vmatpush1.msra.mxu0 0.0
  %953 = vmatprep.subr.mxu0 0.0
  %954 = vmatpush1.msra.mxu0 0.0
  %955 = vmatprep.subr.mxu0 0.0
  %956 = vmatpush1.msra.mxu0 0.0
  %957 = vmatprep.subr.mxu0 0.0
  %958 = vmatpush1.msra.mxu0 0.0
  %959 = vmatprep.subr.mxu0 0.0
  %960 = vmatpush1.msra.mxu0 0.0
  %961 = vmatprep.subr.mxu0 0.0
  %962 = vmatpush1.msra.mxu0 0.0
  %963 = vmatprep.subr.mxu0 0.0
  %964 = vmatpush1.msra.mxu0 0.0
  %965 = vmatprep.subr.mxu0 0.0
  %966 = vmatpush1.msra.mxu0 0.0
  %967 = vmatprep.subr.mxu0 0.0
  %968 = vmatpush1.msra.mxu0 %v925
  %969 = vmatprep.subr.mxu0 0.0
  %970 = vmatpush1.msra.mxu0 %v924
  %971 = vmatprep.subr.mxu0 0.0
  %972 = vmatpush1.msra.mxu0 %v923
  %973 = vmatprep.subr.mxu0 0.0
  %974 = vmatpush1.msra.mxu0 %v922
  %975 = vmatprep.subr.mxu0 0.0
  %976 = vmatpush2.msra.mxu0 0.0
  %977 = vmatprep.subr.mxu0 0.0
  %978 = vmatpush2.msra.mxu0 0.0
  %979 = vmatprep.subr.mxu0 0.0
  %980 = vmatpush2.msra.mxu0 0.0
  %981 = vmatprep.subr.mxu0 0.0
  %982 = vmatpush2.msra.mxu0 0.0
  %983 = vmatprep.subr.mxu0 0.0
  %984 = vmatpush2.msra.mxu0 0.0
  %985 = vmatprep.subr.mxu0 0.0
  %986 = vmatpush2.msra.mxu0 0.0
  %987 = vmatprep.subr.mxu0 0.0
  %988 = vmatpush2.msra.mxu0 0.0
  %989 = vmatprep.subr.mxu0 0.0
  %990 = vmatpush2.msra.mxu0 0.0
  %991 = vmatprep.subr.mxu0 0.0
  %992 = vmatpush2.msra.mxu0 0.0
  %993 = vmatprep.subr.mxu0 0.0
  %994 = vmatpush2.msra.mxu0 0.0
  %995 = vmatprep.subr.mxu0 0.0
  %996 = vmatpush2.msra.mxu0 0.0
  %997 = vmatprep.subr.mxu0 0.0
  %998 = vmatpush2.msra.mxu0 0.0
  %999 = vmatprep.subr.mxu0 0.0
  %1000 = vmatpush2.msra.mxu0 0.0
  %1001 = vmatprep.subr.mxu0 0.0
  %1002 = vmatpush2.msra.mxu0 0.0
  %1003 = vmatprep.subr.mxu0 0.0
  %1004 = vmatpush2.msra.mxu0 0.0
  %1005 = vmatprep.subr.mxu0 0.0
  %1006 = vmatpush2.msra.mxu0 0.0
  %1007 = vmatprep.mubr.f32.mxu0 0.0
  %1008 = vmatmul.mubr.f32.gmra.mxu0 %v74
  %v1009 = vpop.f32.mrf.mxu0
  %v1010 = vadd.f32 0.0, %v1009
  %v1011 = vpop.f32.mrf.mxu0
  %1012 = vmatprep.mubr.f32.mxu0 0.0
  %1013 = vmatmul.mubr.f32.gmra.mxu0 %v77
  %v1014 = vpop.f32.mrf.mxu0
  %v1015 = vadd.f32 0.0, %v1014
  %v1016 = vpop.f32.mrf.mxu0
  %1017 = vmatprep.mubr.f32.mxu0 0.0
  %1018 = vmatmul.mubr.f32.gmra.mxu0 %v80
  %v1019 = vpop.f32.mrf.mxu0
  %v1020 = vadd.f32 0.0, %v1019
  %v1021 = vpop.f32.mrf.mxu0
  %1022 = vmatprep.mubr.f32.mxu0 0.0
  %1023 = vmatmul.mubr.f32.gmra.mxu0 %v83
  %v1024 = vpop.f32.mrf.mxu0
  %v1025 = vadd.f32 0.0, %v1024
  %v1026 = vpop.f32.mrf.mxu0
  %1027 = vmatprep.mubr.f32.mxu0 0.0
  %1028 = vmatmul.mubr.f32.gmra.mxu0 %v86
  %v1029 = vpop.f32.mrf.mxu0
  %v1030 = vadd.f32 0.0, %v1029
  %v1031 = vpop.f32.mrf.mxu0
  %1032 = vmatprep.mubr.f32.mxu0 0.0
  %1033 = vmatmul.mubr.f32.gmra.mxu0 %v89
  %v1034 = vpop.f32.mrf.mxu0
  %v1035 = vadd.f32 0.0, %v1034
  %v1036 = vpop.f32.mrf.mxu0
  %1037 = vmatprep.mubr.f32.mxu0 0.0
  %1038 = vmatmul.mubr.f32.gmra.mxu0 %v92
  %v1039 = vpop.f32.mrf.mxu0
  %v1040 = vadd.f32 0.0, %v1039
  %v1041 = vpop.f32.mrf.mxu0
  %1042 = vmatprep.mubr.f32.mxu0 0.0
  %1043 = vmatmul.mubr.f32.gmra.mxu0 %v95
  %v1044 = vpop.f32.mrf.mxu0
  %v1045 = vadd.f32 0.0, %v1044
  %v1046 = vpop.f32.mrf.mxu0
  %1047 = vmatprep.mubr.f32.mxu0 0.0
  %1048 = vmatmul.mubr.f32.gmra.mxu0 %v98
  %v1049 = vpop.f32.mrf.mxu0
  %v1050 = vadd.f32 0.0, %v1049
  %v1051 = vpop.f32.mrf.mxu0
  %1052 = vmatprep.mubr.f32.mxu0 0.0
  %1053 = vmatmul.mubr.f32.gmra.mxu0 %v101
  %v1054 = vpop.f32.mrf.mxu0
  %v1055 = vadd.f32 0.0, %v1054
  %v1056 = vpop.f32.mrf.mxu0
  %1057 = vmatprep.mubr.f32.mxu0 0.0
  %1058 = vmatmul.mubr.f32.gmra.mxu0 %v104
  %v1059 = vpop.f32.mrf.mxu0
  %v1060 = vadd.f32 0.0, %v1059
  %v1061 = vpop.f32.mrf.mxu0
  %1062 = vmatprep.mubr.f32.mxu0 0.0
  %1063 = vmatmul.mubr.f32.gmra.mxu0 %v107
  %v1064 = vpop.f32.mrf.mxu0
  %v1065 = vadd.f32 0.0, %v1064
  %v1066 = vpop.f32.mrf.mxu0
  %1067 = vmatprep.mubr.f32.mxu0 0.0
  %1068 = vmatmul.mubr.f32.gmra.mxu0 %v110
  %v1069 = vpop.f32.mrf.mxu0
  %v1070 = vadd.f32 0.0, %v1069
  %v1071 = vpop.f32.mrf.mxu0
  %1072 = vmatprep.mubr.f32.mxu0 0.0
  %1073 = vmatmul.mubr.f32.gmra.mxu0 %v113
  %v1074 = vpop.f32.mrf.mxu0
  %v1075 = vadd.f32 0.0, %v1074
  %v1076 = vpop.f32.mrf.mxu0
  %1077 = vmatprep.mubr.f32.mxu0 0.0
  %1078 = vmatmul.mubr.f32.gmra.mxu0 %v116
  %v1079 = vpop.f32.mrf.mxu0
  %v1080 = vadd.f32 0.0, %v1079
  %v1081 = vpop.f32.mrf.mxu0
  %1082 = vmatprep.mubr.f32.mxu0 0.0
  %1083 = vmatmul.mubr.f32.gmra.mxu0 %v119
  %v1084 = vpop.f32.mrf.mxu0
  %v1085 = vadd.f32 0.0, %v1084
  %v1086 = vpop.f32.mrf.mxu0
  %1087 = vdwg.mxu0
  %v1088 = vadd.f32 %v927, %v1010
  %v1089 = vadd.f32 %v928, %v1015
  %v1090 = vadd.f32 %v929, %v1020
  %v1091 = vadd.f32 %v930, %v1025
  %v1092 = vadd.f32 %v931, %v1030
  %v1093 = vadd.f32 %v932, %v1035
  %v1094 = vadd.f32 %v933, %v1040
  %v1095 = vadd.f32 %v934, %v1045
  %v1096 = vadd.f32 %v935, %v1050
  %v1097 = vadd.f32 %v936, %v1055
  %v1098 = vadd.f32 %v937, %v1060
  %v1099 = vadd.f32 %v938, %v1065
  %v1100 = vadd.f32 %v939, %v1070
  %v1101 = vadd.f32 %v940, %v1075
  %v1102 = vadd.f32 %v941, %v1080
  %v1103 = vadd.f32 %v942, %v1085
  %v1104 = vxor.u32 %v1088, 2147483648
  %v1105 = vxor.u32 %v1089, 2147483648
  %v1106 = vxor.u32 %v1090, 2147483648
  %v1107 = vxor.u32 %v1091, 2147483648
  %v1108 = vmul.f32 %v1104, 1.442695
  %v1109 = vpow.pop %v1108
  %v1110 = vmul.f32 %v1105, 1.442695
  %v1111 = vpow.pop %v1110
  %v1112 = vmul.f32 %v1106, 1.442695
  %v1113 = vpow.pop %v1112
  %v1114 = vmul.f32 %v1107, 1.442695
  %v1115 = vpow.pop %v1114
  %v1116 = vadd.f32 %v1109, 1.0
  %v1117 = vadd.f32 %v1111, 1.0
  %v1118 = vadd.f32 %v1113, 1.0
  %v1119 = vadd.f32 %v1115, 1.0
  %v1120 = vrcp.pop %v1116
  %v1121 = vmul.f32 1.0, %v1120
  %v1122 = vrcp.pop %v1117
  %v1123 = vmul.f32 1.0, %v1122
  %v1124 = vrcp.pop %v1118
  %v1125 = vmul.f32 1.0, %v1124
  %v1126 = vrcp.pop %v1119
  %v1127 = vmul.f32 1.0, %v1126
  %v1128 = vxor.u32 %v1092, 2147483648
  %v1129 = vxor.u32 %v1093, 2147483648
  %v1130 = vxor.u32 %v1094, 2147483648
  %v1131 = vxor.u32 %v1095, 2147483648
  %v1132 = vmul.f32 %v1128, 1.442695
  %v1133 = vpow.pop %v1132
  %v1134 = vmul.f32 %v1129, 1.442695
  %v1135 = vpow.pop %v1134
  %v1136 = vmul.f32 %v1130, 1.442695
  %v1137 = vpow.pop %v1136
  %v1138 = vmul.f32 %v1131, 1.442695
  %v1139 = vpow.pop %v1138
  %v1140 = vadd.f32 %v1133, 1.0
  %v1141 = vadd.f32 %v1135, 1.0
  %v1142 = vadd.f32 %v1137, 1.0
  %v1143 = vadd.f32 %v1139, 1.0
  %v1144 = vrcp.pop %v1140
  %v1145 = vmul.f32 1.0, %v1144
  %v1146 = vrcp.pop %v1141
  %v1147 = vmul.f32 1.0, %v1146
  %v1148 = vrcp.pop %v1142
  %v1149 = vmul.f32 1.0, %v1148
  %v1150 = vrcp.pop %v1143
  %v1151 = vmul.f32 1.0, %v1150
  %v1152 = vtanh.pop %v1096
  %v1153 = vtanh.pop %v1097
  %v1154 = vtanh.pop %v1098
  %v1155 = vtanh.pop %v1099
  %v1156 = vxor.u32 %v1100, 2147483648
  %v1157 = vxor.u32 %v1101, 2147483648
  %v1158 = vxor.u32 %v1102, 2147483648
  %v1159 = vxor.u32 %v1103, 2147483648
  %v1160 = vmul.f32 %v1156, 1.442695
  %v1161 = vpow.pop %v1160
  %v1162 = vmul.f32 %v1157, 1.442695
  %v1163 = vpow.pop %v1162
  %v1164 = vmul.f32 %v1158, 1.442695
  %v1165 = vpow.pop %v1164
  %v1166 = vmul.f32 %v1159, 1.442695
  %v1167 = vpow.pop %v1166
  %v1168 = vadd.f32 %v1161, 1.0
  %v1169 = vadd.f32 %v1163, 1.0
  %v1170 = vadd.f32 %v1165, 1.0
  %v1171 = vadd.f32 %v1167, 1.0
  %v1172 = vrcp.pop %v1168
  %v1173 = vmul.f32 1.0, %v1172
  %v1174 = vrcp.pop %v1169
  %v1175 = vmul.f32 1.0, %v1174
  %v1176 = vrcp.pop %v1170
  %v1177 = vmul.f32 1.0, %v1176
  %v1178 = vrcp.pop %v1171
  %v1179 = vmul.f32 1.0, %v1178
  %v1180 = vmul.f32 %v1145, %v914
  %v1181 = vmul.f32 %v1147, %v915
  %v1182 = vmul.f32 %v1149, %v916
  %v1183 = vmul.f32 %v1151, %v917
  %v1184 = vmul.f32 %v1121, %v1152
  %v1185 = vmul.f32 %v1123, %v1153
  %v1186 = vmul.f32 %v1125, %v1154
  %v1187 = vmul.f32 %v1127, %v1155
  %v1188 = vadd.f32 %v1180, %v1184
  %v1189 = vadd.f32 %v1181, %v1185
  %v1190 = vadd.f32 %v1182, %v1186
  %v1191 = vadd.f32 %v1183, %v1187
  %v1192 = vtanh.pop %v1188
  %v1193 = vtanh.pop %v1189
  %v1194 = vtanh.pop %v1190
  %v1195 = vtanh.pop %v1191
  %v1196 = vmul.f32 %v1173, %v1192
  %v1197 = vmul.f32 %v1175, %v1193
  %v1198 = vmul.f32 %v1177, %v1194
  %v1199 = vmul.f32 %v1179, %v1195
  %s1200 = scalar_lea.vmem %s0, 512
  %v1201 = vld [vmem:[%s1200] sm:$0xff]
  %v1202 = vld [vmem:[%s1200 + $0x8] sm:$0xff]
  %v1203 = vld [vmem:[%s1200 + $0x10] sm:$0xff]
  %v1204 = vld [vmem:[%s1200 + $0x18] sm:$0xff]
  %v1205 = vld [vmem:[%s1200 + $0x20] sm:$0xff]
  %v1206 = vld [vmem:[%s1200 + $0x28] sm:$0xff]
  %v1207 = vld [vmem:[%s1200 + $0x30] sm:$0xff]
  %v1208 = vld [vmem:[%s1200 + $0x38] sm:$0xff]
  %v1209 = vld [vmem:[%s1200 + $0x40] sm:$0xff]
  %v1210 = vld [vmem:[%s1200 + $0x48] sm:$0xff]
  %v1211 = vld [vmem:[%s1200 + $0x50] sm:$0xff]
  %v1212 = vld [vmem:[%s1200 + $0x58] sm:$0xff]
  %v1213 = vld [vmem:[%s1200 + $0x60] sm:$0xff]
  %v1214 = vld [vmem:[%s1200 + $0x68] sm:$0xff]
  %v1215 = vld [vmem:[%s1200 + $0x70] sm:$0xff]
  %v1216 = vld [vmem:[%s1200 + $0x78] sm:$0xff]
  %1217 = vmatprep.subr.mxu0 0.0
  %1218 = vmatpush1.msra.mxu0 0.0
  %1219 = vmatprep.subr.mxu0 0.0
  %1220 = vmatpush1.msra.mxu0 0.0
  %1221 = vmatprep.subr.mxu0 0.0
  %1222 = vmatpush1.msra.mxu0 0.0
  %1223 = vmatprep.subr.mxu0 0.0
  %1224 = vmatpush1.msra.mxu0 0.0
  %1225 = vmatprep.subr.mxu0 0.0
  %1226 = vmatpush1.msra.mxu0 0.0
  %1227 = vmatprep.subr.mxu0 0.0
  %1228 = vmatpush1.msra.mxu0 0.0
  %1229 = vmatprep.subr.mxu0 0.0
  %1230 = vmatpush1.msra.mxu0 0.0
  %1231 = vmatprep.subr.mxu0 0.0
  %1232 = vmatpush1.msra.mxu0 0.0
  %1233 = vmatprep.subr.mxu0 0.0
  %1234 = vmatpush1.msra.mxu0 0.0
  %1235 = vmatprep.subr.mxu0 0.0
  %1236 = vmatpush1.msra.mxu0 0.0
  %1237 = vmatprep.subr.mxu0 0.0
  %1238 = vmatpush1.msra.mxu0 0.0
  %1239 = vmatprep.subr.mxu0 0.0
  %1240 = vmatpush1.msra.mxu0 0.0
  %1241 = vmatprep.subr.mxu0 0.0
  %1242 = vmatpush1.msra.mxu0 %v1199
  %1243 = vmatprep.subr.mxu0 0.0
  %1244 = vmatpush1.msra.mxu0 %v1198
  %1245 = vmatprep.subr.mxu0 0.0
  %1246 = vmatpush1.msra.mxu0 %v1197
  %1247 = vmatprep.subr.mxu0 0.0
  %1248 = vmatpush1.msra.mxu0 %v1196
  %1249 = vmatprep.subr.mxu0 0.0
  %1250 = vmatpush2.msra.mxu0 0.0
  %1251 = vmatprep.subr.mxu0 0.0
  %1252 = vmatpush2.msra.mxu0 0.0
  %1253 = vmatprep.subr.mxu0 0.0
  %1254 = vmatpush2.msra.mxu0 0.0
  %1255 = vmatprep.subr.mxu0 0.0
  %1256 = vmatpush2.msra.mxu0 0.0
  %1257 = vmatprep.subr.mxu0 0.0
  %1258 = vmatpush2.msra.mxu0 0.0
  %1259 = vmatprep.subr.mxu0 0.0
  %1260 = vmatpush2.msra.mxu0 0.0
  %1261 = vmatprep.subr.mxu0 0.0
  %1262 = vmatpush2.msra.mxu0 0.0
  %1263 = vmatprep.subr.mxu0 0.0
  %1264 = vmatpush2.msra.mxu0 0.0
  %1265 = vmatprep.subr.mxu0 0.0
  %1266 = vmatpush2.msra.mxu0 0.0
  %1267 = vmatprep.subr.mxu0 0.0
  %1268 = vmatpush2.msra.mxu0 0.0
  %1269 = vmatprep.subr.mxu0 0.0
  %1270 = vmatpush2.msra.mxu0 0.0
  %1271 = vmatprep.subr.mxu0 0.0
  %1272 = vmatpush2.msra.mxu0 0.0
  %1273 = vmatprep.subr.mxu0 0.0
  %1274 = vmatpush2.msra.mxu0 0.0
  %1275 = vmatprep.subr.mxu0 0.0
  %1276 = vmatpush2.msra.mxu0 0.0
  %1277 = vmatprep.subr.mxu0 0.0
  %1278 = vmatpush2.msra.mxu0 0.0
  %1279 = vmatprep.subr.mxu0 0.0
  %1280 = vmatpush2.msra.mxu0 0.0
  %1281 = vmatprep.mubr.f32.mxu0 0.0
  %1282 = vmatmul.mubr.f32.gmra.mxu0 %v74
  %v1283 = vpop.f32.mrf.mxu0
  %v1284 = vadd.f32 0.0, %v1283
  %v1285 = vpop.f32.mrf.mxu0
  %1286 = vmatprep.mubr.f32.mxu0 0.0
  %1287 = vmatmul.mubr.f32.gmra.mxu0 %v77
  %v1288 = vpop.f32.mrf.mxu0
  %v1289 = vadd.f32 0.0, %v1288
  %v1290 = vpop.f32.mrf.mxu0
  %1291 = vmatprep.mubr.f32.mxu0 0.0
  %1292 = vmatmul.mubr.f32.gmra.mxu0 %v80
  %v1293 = vpop.f32.mrf.mxu0
  %v1294 = vadd.f32 0.0, %v1293
  %v1295 = vpop.f32.mrf.mxu0
  %1296 = vmatprep.mubr.f32.mxu0 0.0
  %1297 = vmatmul.mubr.f32.gmra.mxu0 %v83
  %v1298 = vpop.f32.mrf.mxu0
  %v1299 = vadd.f32 0.0, %v1298
  %v1300 = vpop.f32.mrf.mxu0
  %1301 = vmatprep.mubr.f32.mxu0 0.0
  %1302 = vmatmul.mubr.f32.gmra.mxu0 %v86
  %v1303 = vpop.f32.mrf.mxu0
  %v1304 = vadd.f32 0.0, %v1303
  %v1305 = vpop.f32.mrf.mxu0
  %1306 = vmatprep.mubr.f32.mxu0 0.0
  %1307 = vmatmul.mubr.f32.gmra.mxu0 %v89
  %v1308 = vpop.f32.mrf.mxu0
  %v1309 = vadd.f32 0.0, %v1308
  %v1310 = vpop.f32.mrf.mxu0
  %1311 = vmatprep.mubr.f32.mxu0 0.0
  %1312 = vmatmul.mubr.f32.gmra.mxu0 %v92
  %v1313 = vpop.f32.mrf.mxu0
  %v1314 = vadd.f32 0.0, %v1313
  %v1315 = vpop.f32.mrf.mxu0
  %1316 = vmatprep.mubr.f32.mxu0 0.0
  %1317 = vmatmul.mubr.f32.gmra.mxu0 %v95
  %v1318 = vpop.f32.mrf.mxu0
  %v1319 = vadd.f32 0.0, %v1318
  %v1320 = vpop.f32.mrf.mxu0
  %1321 = vmatprep.mubr.f32.mxu0 0.0
  %1322 = vmatmul.mubr.f32.gmra.mxu0 %v98
  %v1323 = vpop.f32.mrf.mxu0
  %v1324 = vadd.f32 0.0, %v1323
  %v1325 = vpop.f32.mrf.mxu0
  %1326 = vmatprep.mubr.f32.mxu0 0.0
  %1327 = vmatmul.mubr.f32.gmra.mxu0 %v101
  %v1328 = vpop.f32.mrf.mxu0
  %v1329 = vadd.f32 0.0, %v1328
  %v1330 = vpop.f32.mrf.mxu0
  %1331 = vmatprep.mubr.f32.mxu0 0.0
  %1332 = vmatmul.mubr.f32.gmra.mxu0 %v104
  %v1333 = vpop.f32.mrf.mxu0
  %v1334 = vadd.f32 0.0, %v1333
  %v1335 = vpop.f32.mrf.mxu0
  %1336 = vmatprep.mubr.f32.mxu0 0.0
  %1337 = vmatmul.mubr.f32.gmra.mxu0 %v107
  %v1338 = vpop.f32.mrf.mxu0
  %v1339 = vadd.f32 0.0, %v1338
  %v1340 = vpop.f32.mrf.mxu0
  %1341 = vmatprep.mubr.f32.mxu0 0.0
  %1342 = vmatmul.mubr.f32.gmra.mxu0 %v110
  %v1343 = vpop.f32.mrf.mxu0
  %v1344 = vadd.f32 0.0, %v1343
  %v1345 = vpop.f32.mrf.mxu0
  %1346 = vmatprep.mubr.f32.mxu0 0.0
  %1347 = vmatmul.mubr.f32.gmra.mxu0 %v113
  %v1348 = vpop.f32.mrf.mxu0
  %v1349 = vadd.f32 0.0, %v1348
  %v1350 = vpop.f32.mrf.mxu0
  %1351 = vmatprep.mubr.f32.mxu0 0.0
  %1352 = vmatmul.mubr.f32.gmra.mxu0 %v116
  %v1353 = vpop.f32.mrf.mxu0
  %v1354 = vadd.f32 0.0, %v1353
  %v1355 = vpop.f32.mrf.mxu0
  %1356 = vmatprep.mubr.f32.mxu0 0.0
  %1357 = vmatmul.mubr.f32.gmra.mxu0 %v119
  %v1358 = vpop.f32.mrf.mxu0
  %v1359 = vadd.f32 0.0, %v1358
  %v1360 = vpop.f32.mrf.mxu0
  %1361 = vdwg.mxu0
  %v1362 = vadd.f32 %v1201, %v1284
  %v1363 = vadd.f32 %v1202, %v1289
  %v1364 = vadd.f32 %v1203, %v1294
  %v1365 = vadd.f32 %v1204, %v1299
  %v1366 = vadd.f32 %v1205, %v1304
  %v1367 = vadd.f32 %v1206, %v1309
  %v1368 = vadd.f32 %v1207, %v1314
  %v1369 = vadd.f32 %v1208, %v1319
  %v1370 = vadd.f32 %v1209, %v1324
  %v1371 = vadd.f32 %v1210, %v1329
  %v1372 = vadd.f32 %v1211, %v1334
  %v1373 = vadd.f32 %v1212, %v1339
  %v1374 = vadd.f32 %v1213, %v1344
  %v1375 = vadd.f32 %v1214, %v1349
  %v1376 = vadd.f32 %v1215, %v1354
  %v1377 = vadd.f32 %v1216, %v1359
  %v1378 = vxor.u32 %v1362, 2147483648
  %v1379 = vxor.u32 %v1363, 2147483648
  %v1380 = vxor.u32 %v1364, 2147483648
  %v1381 = vxor.u32 %v1365, 2147483648
  %v1382 = vmul.f32 %v1378, 1.442695
  %v1383 = vpow.pop %v1382
  %v1384 = vmul.f32 %v1379, 1.442695
  %v1385 = vpow.pop %v1384
  %v1386 = vmul.f32 %v1380, 1.442695
  %v1387 = vpow.pop %v1386
  %v1388 = vmul.f32 %v1381, 1.442695
  %v1389 = vpow.pop %v1388
  %v1390 = vadd.f32 %v1383, 1.0
  %v1391 = vadd.f32 %v1385, 1.0
  %v1392 = vadd.f32 %v1387, 1.0
  %v1393 = vadd.f32 %v1389, 1.0
  %v1394 = vrcp.pop %v1390
  %v1395 = vmul.f32 1.0, %v1394
  %v1396 = vrcp.pop %v1391
  %v1397 = vmul.f32 1.0, %v1396
  %v1398 = vrcp.pop %v1392
  %v1399 = vmul.f32 1.0, %v1398
  %v1400 = vrcp.pop %v1393
  %v1401 = vmul.f32 1.0, %v1400
  %v1402 = vxor.u32 %v1366, 2147483648
  %v1403 = vxor.u32 %v1367, 2147483648
  %v1404 = vxor.u32 %v1368, 2147483648
  %v1405 = vxor.u32 %v1369, 2147483648
  %v1406 = vmul.f32 %v1402, 1.442695
  %v1407 = vpow.pop %v1406
  %v1408 = vmul.f32 %v1403, 1.442695
  %v1409 = vpow.pop %v1408
  %v1410 = vmul.f32 %v1404, 1.442695
  %v1411 = vpow.pop %v1410
  %v1412 = vmul.f32 %v1405, 1.442695
  %v1413 = vpow.pop %v1412
  %v1414 = vadd.f32 %v1407, 1.0
  %v1415 = vadd.f32 %v1409, 1.0
  %v1416 = vadd.f32 %v1411, 1.0
  %v1417 = vadd.f32 %v1413, 1.0
  %v1418 = vrcp.pop %v1414
  %v1419 = vmul.f32 1.0, %v1418
  %v1420 = vrcp.pop %v1415
  %v1421 = vmul.f32 1.0, %v1420
  %v1422 = vrcp.pop %v1416
  %v1423 = vmul.f32 1.0, %v1422
  %v1424 = vrcp.pop %v1417
  %v1425 = vmul.f32 1.0, %v1424
  %v1426 = vtanh.pop %v1370
  %v1427 = vtanh.pop %v1371
  %v1428 = vtanh.pop %v1372
  %v1429 = vtanh.pop %v1373
  %v1430 = vxor.u32 %v1374, 2147483648
  %v1431 = vxor.u32 %v1375, 2147483648
  %v1432 = vxor.u32 %v1376, 2147483648
  %v1433 = vxor.u32 %v1377, 2147483648
  %v1434 = vmul.f32 %v1430, 1.442695
  %v1435 = vpow.pop %v1434
  %v1436 = vmul.f32 %v1431, 1.442695
  %v1437 = vpow.pop %v1436
  %v1438 = vmul.f32 %v1432, 1.442695
  %v1439 = vpow.pop %v1438
  %v1440 = vmul.f32 %v1433, 1.442695
  %v1441 = vpow.pop %v1440
  %v1442 = vadd.f32 %v1435, 1.0
  %v1443 = vadd.f32 %v1437, 1.0
  %v1444 = vadd.f32 %v1439, 1.0
  %v1445 = vadd.f32 %v1441, 1.0
  %v1446 = vrcp.pop %v1442
  %v1447 = vmul.f32 1.0, %v1446
  %v1448 = vrcp.pop %v1443
  %v1449 = vmul.f32 1.0, %v1448
  %v1450 = vrcp.pop %v1444
  %v1451 = vmul.f32 1.0, %v1450
  %v1452 = vrcp.pop %v1445
  %v1453 = vmul.f32 1.0, %v1452
  %v1454 = vmul.f32 %v1419, %v1188
  %v1455 = vmul.f32 %v1421, %v1189
  %v1456 = vmul.f32 %v1423, %v1190
  %v1457 = vmul.f32 %v1425, %v1191
  %v1458 = vmul.f32 %v1395, %v1426
  %v1459 = vmul.f32 %v1397, %v1427
  %v1460 = vmul.f32 %v1399, %v1428
  %v1461 = vmul.f32 %v1401, %v1429
  %v1462 = vadd.f32 %v1454, %v1458
  %v1463 = vadd.f32 %v1455, %v1459
  %v1464 = vadd.f32 %v1456, %v1460
  %v1465 = vadd.f32 %v1457, %v1461
  %v1466 = vtanh.pop %v1462
  %v1467 = vtanh.pop %v1463
  %v1468 = vtanh.pop %v1464
  %v1469 = vtanh.pop %v1465
  %v1470 = vmul.f32 %v1447, %v1466
  %v1471 = vmul.f32 %v1449, %v1467
  %v1472 = vmul.f32 %v1451, %v1468
  %v1473 = vmul.f32 %v1453, %v1469
  %s1474 = scalar_lea.vmem %s0, 640
  %v1475 = vld [vmem:[%s1474] sm:$0xff]
  %v1476 = vld [vmem:[%s1474 + $0x8] sm:$0xff]
  %v1477 = vld [vmem:[%s1474 + $0x10] sm:$0xff]
  %v1478 = vld [vmem:[%s1474 + $0x18] sm:$0xff]
  %v1479 = vld [vmem:[%s1474 + $0x20] sm:$0xff]
  %v1480 = vld [vmem:[%s1474 + $0x28] sm:$0xff]
  %v1481 = vld [vmem:[%s1474 + $0x30] sm:$0xff]
  %v1482 = vld [vmem:[%s1474 + $0x38] sm:$0xff]
  %v1483 = vld [vmem:[%s1474 + $0x40] sm:$0xff]
  %v1484 = vld [vmem:[%s1474 + $0x48] sm:$0xff]
  %v1485 = vld [vmem:[%s1474 + $0x50] sm:$0xff]
  %v1486 = vld [vmem:[%s1474 + $0x58] sm:$0xff]
  %v1487 = vld [vmem:[%s1474 + $0x60] sm:$0xff]
  %v1488 = vld [vmem:[%s1474 + $0x68] sm:$0xff]
  %v1489 = vld [vmem:[%s1474 + $0x70] sm:$0xff]
  %v1490 = vld [vmem:[%s1474 + $0x78] sm:$0xff]
  %1491 = vmatprep.subr.mxu0 0.0
  %1492 = vmatpush1.msra.mxu0 0.0
  %1493 = vmatprep.subr.mxu0 0.0
  %1494 = vmatpush1.msra.mxu0 0.0
  %1495 = vmatprep.subr.mxu0 0.0
  %1496 = vmatpush1.msra.mxu0 0.0
  %1497 = vmatprep.subr.mxu0 0.0
  %1498 = vmatpush1.msra.mxu0 0.0
  %1499 = vmatprep.subr.mxu0 0.0
  %1500 = vmatpush1.msra.mxu0 0.0
  %1501 = vmatprep.subr.mxu0 0.0
  %1502 = vmatpush1.msra.mxu0 0.0
  %1503 = vmatprep.subr.mxu0 0.0
  %1504 = vmatpush1.msra.mxu0 0.0
  %1505 = vmatprep.subr.mxu0 0.0
  %1506 = vmatpush1.msra.mxu0 0.0
  %1507 = vmatprep.subr.mxu0 0.0
  %1508 = vmatpush1.msra.mxu0 0.0
  %1509 = vmatprep.subr.mxu0 0.0
  %1510 = vmatpush1.msra.mxu0 0.0
  %1511 = vmatprep.subr.mxu0 0.0
  %1512 = vmatpush1.msra.mxu0 0.0
  %1513 = vmatprep.subr.mxu0 0.0
  %1514 = vmatpush1.msra.mxu0 0.0
  %1515 = vmatprep.subr.mxu0 0.0
  %1516 = vmatpush1.msra.mxu0 %v1473
  %1517 = vmatprep.subr.mxu0 0.0
  %1518 = vmatpush1.msra.mxu0 %v1472
  %1519 = vmatprep.subr.mxu0 0.0
  %1520 = vmatpush1.msra.mxu0 %v1471
  %1521 = vmatprep.subr.mxu0 0.0
  %1522 = vmatpush1.msra.mxu0 %v1470
  %1523 = vmatprep.subr.mxu0 0.0
  %1524 = vmatpush2.msra.mxu0 0.0
  %1525 = vmatprep.subr.mxu0 0.0
  %1526 = vmatpush2.msra.mxu0 0.0
  %1527 = vmatprep.subr.mxu0 0.0
  %1528 = vmatpush2.msra.mxu0 0.0
  %1529 = vmatprep.subr.mxu0 0.0
  %1530 = vmatpush2.msra.mxu0 0.0
  %1531 = vmatprep.subr.mxu0 0.0
  %1532 = vmatpush2.msra.mxu0 0.0
  %1533 = vmatprep.subr.mxu0 0.0
  %1534 = vmatpush2.msra.mxu0 0.0
  %1535 = vmatprep.subr.mxu0 0.0
  %1536 = vmatpush2.msra.mxu0 0.0
  %1537 = vmatprep.subr.mxu0 0.0
  %1538 = vmatpush2.msra.mxu0 0.0
  %1539 = vmatprep.subr.mxu0 0.0
  %1540 = vmatpush2.msra.mxu0 0.0
  %1541 = vmatprep.subr.mxu0 0.0
  %1542 = vmatpush2.msra.mxu0 0.0
  %1543 = vmatprep.subr.mxu0 0.0
  %1544 = vmatpush2.msra.mxu0 0.0
  %1545 = vmatprep.subr.mxu0 0.0
  %1546 = vmatpush2.msra.mxu0 0.0
  %1547 = vmatprep.subr.mxu0 0.0
  %1548 = vmatpush2.msra.mxu0 0.0
  %1549 = vmatprep.subr.mxu0 0.0
  %1550 = vmatpush2.msra.mxu0 0.0
  %1551 = vmatprep.subr.mxu0 0.0
  %1552 = vmatpush2.msra.mxu0 0.0
  %1553 = vmatprep.subr.mxu0 0.0
  %1554 = vmatpush2.msra.mxu0 0.0
  %1555 = vmatprep.mubr.f32.mxu0 0.0
  %1556 = vmatmul.mubr.f32.gmra.mxu0 %v74
  %v1557 = vpop.f32.mrf.mxu0
  %v1558 = vadd.f32 0.0, %v1557
  %v1559 = vpop.f32.mrf.mxu0
  %1560 = vmatprep.mubr.f32.mxu0 0.0
  %1561 = vmatmul.mubr.f32.gmra.mxu0 %v77
  %v1562 = vpop.f32.mrf.mxu0
  %v1563 = vadd.f32 0.0, %v1562
  %v1564 = vpop.f32.mrf.mxu0
  %1565 = vmatprep.mubr.f32.mxu0 0.0
  %1566 = vmatmul.mubr.f32.gmra.mxu0 %v80
  %v1567 = vpop.f32.mrf.mxu0
  %v1568 = vadd.f32 0.0, %v1567
  %v1569 = vpop.f32.mrf.mxu0
  %1570 = vmatprep.mubr.f32.mxu0 0.0
  %1571 = vmatmul.mubr.f32.gmra.mxu0 %v83
  %v1572 = vpop.f32.mrf.mxu0
  %v1573 = vadd.f32 0.0, %v1572
  %v1574 = vpop.f32.mrf.mxu0
  %1575 = vmatprep.mubr.f32.mxu0 0.0
  %1576 = vmatmul.mubr.f32.gmra.mxu0 %v86
  %v1577 = vpop.f32.mrf.mxu0
  %v1578 = vadd.f32 0.0, %v1577
  %v1579 = vpop.f32.mrf.mxu0
  %1580 = vmatprep.mubr.f32.mxu0 0.0
  %1581 = vmatmul.mubr.f32.gmra.mxu0 %v89
  %v1582 = vpop.f32.mrf.mxu0
  %v1583 = vadd.f32 0.0, %v1582
  %v1584 = vpop.f32.mrf.mxu0
  %1585 = vmatprep.mubr.f32.mxu0 0.0
  %1586 = vmatmul.mubr.f32.gmra.mxu0 %v92
  %v1587 = vpop.f32.mrf.mxu0
  %v1588 = vadd.f32 0.0, %v1587
  %v1589 = vpop.f32.mrf.mxu0
  %1590 = vmatprep.mubr.f32.mxu0 0.0
  %1591 = vmatmul.mubr.f32.gmra.mxu0 %v95
  %v1592 = vpop.f32.mrf.mxu0
  %v1593 = vadd.f32 0.0, %v1592
  %v1594 = vpop.f32.mrf.mxu0
  %1595 = vmatprep.mubr.f32.mxu0 0.0
  %1596 = vmatmul.mubr.f32.gmra.mxu0 %v98
  %v1597 = vpop.f32.mrf.mxu0
  %v1598 = vadd.f32 0.0, %v1597
  %v1599 = vpop.f32.mrf.mxu0
  %1600 = vmatprep.mubr.f32.mxu0 0.0
  %1601 = vmatmul.mubr.f32.gmra.mxu0 %v101
  %v1602 = vpop.f32.mrf.mxu0
  %v1603 = vadd.f32 0.0, %v1602
  %v1604 = vpop.f32.mrf.mxu0
  %1605 = vmatprep.mubr.f32.mxu0 0.0
  %1606 = vmatmul.mubr.f32.gmra.mxu0 %v104
  %v1607 = vpop.f32.mrf.mxu0
  %v1608 = vadd.f32 0.0, %v1607
  %v1609 = vpop.f32.mrf.mxu0
  %1610 = vmatprep.mubr.f32.mxu0 0.0
  %1611 = vmatmul.mubr.f32.gmra.mxu0 %v107
  %v1612 = vpop.f32.mrf.mxu0
  %v1613 = vadd.f32 0.0, %v1612
  %v1614 = vpop.f32.mrf.mxu0
  %1615 = vmatprep.mubr.f32.mxu0 0.0
  %1616 = vmatmul.mubr.f32.gmra.mxu0 %v110
  %v1617 = vpop.f32.mrf.mxu0
  %v1618 = vadd.f32 0.0, %v1617
  %v1619 = vpop.f32.mrf.mxu0
  %1620 = vmatprep.mubr.f32.mxu0 0.0
  %1621 = vmatmul.mubr.f32.gmra.mxu0 %v113
  %v1622 = vpop.f32.mrf.mxu0
  %v1623 = vadd.f32 0.0, %v1622
  %v1624 = vpop.f32.mrf.mxu0
  %1625 = vmatprep.mubr.f32.mxu0 0.0
  %1626 = vmatmul.mubr.f32.gmra.mxu0 %v116
  %v1627 = vpop.f32.mrf.mxu0
  %v1628 = vadd.f32 0.0, %v1627
  %v1629 = vpop.f32.mrf.mxu0
  %1630 = vmatprep.mubr.f32.mxu0 0.0
  %1631 = vmatmul.mubr.f32.gmra.mxu0 %v119
  %v1632 = vpop.f32.mrf.mxu0
  %v1633 = vadd.f32 0.0, %v1632
  %v1634 = vpop.f32.mrf.mxu0
  %1635 = vdwg.mxu0
  %v1636 = vadd.f32 %v1475, %v1558
  %v1637 = vadd.f32 %v1476, %v1563
  %v1638 = vadd.f32 %v1477, %v1568
  %v1639 = vadd.f32 %v1478, %v1573
  %v1640 = vadd.f32 %v1479, %v1578
  %v1641 = vadd.f32 %v1480, %v1583
  %v1642 = vadd.f32 %v1481, %v1588
  %v1643 = vadd.f32 %v1482, %v1593
  %v1644 = vadd.f32 %v1483, %v1598
  %v1645 = vadd.f32 %v1484, %v1603
  %v1646 = vadd.f32 %v1485, %v1608
  %v1647 = vadd.f32 %v1486, %v1613
  %v1648 = vadd.f32 %v1487, %v1618
  %v1649 = vadd.f32 %v1488, %v1623
  %v1650 = vadd.f32 %v1489, %v1628
  %v1651 = vadd.f32 %v1490, %v1633
  %v1652 = vxor.u32 %v1636, 2147483648
  %v1653 = vxor.u32 %v1637, 2147483648
  %v1654 = vxor.u32 %v1638, 2147483648
  %v1655 = vxor.u32 %v1639, 2147483648
  %v1656 = vmul.f32 %v1652, 1.442695
  %v1657 = vpow.pop %v1656
  %v1658 = vmul.f32 %v1653, 1.442695
  %v1659 = vpow.pop %v1658
  %v1660 = vmul.f32 %v1654, 1.442695
  %v1661 = vpow.pop %v1660
  %v1662 = vmul.f32 %v1655, 1.442695
  %v1663 = vpow.pop %v1662
  %v1664 = vadd.f32 %v1657, 1.0
  %v1665 = vadd.f32 %v1659, 1.0
  %v1666 = vadd.f32 %v1661, 1.0
  %v1667 = vadd.f32 %v1663, 1.0
  %v1668 = vrcp.pop %v1664
  %v1669 = vmul.f32 1.0, %v1668
  %v1670 = vrcp.pop %v1665
  %v1671 = vmul.f32 1.0, %v1670
  %v1672 = vrcp.pop %v1666
  %v1673 = vmul.f32 1.0, %v1672
  %v1674 = vrcp.pop %v1667
  %v1675 = vmul.f32 1.0, %v1674
  %v1676 = vxor.u32 %v1640, 2147483648
  %v1677 = vxor.u32 %v1641, 2147483648
  %v1678 = vxor.u32 %v1642, 2147483648
  %v1679 = vxor.u32 %v1643, 2147483648
  %v1680 = vmul.f32 %v1676, 1.442695
  %v1681 = vpow.pop %v1680
  %v1682 = vmul.f32 %v1677, 1.442695
  %v1683 = vpow.pop %v1682
  %v1684 = vmul.f32 %v1678, 1.442695
  %v1685 = vpow.pop %v1684
  %v1686 = vmul.f32 %v1679, 1.442695
  %v1687 = vpow.pop %v1686
  %v1688 = vadd.f32 %v1681, 1.0
  %v1689 = vadd.f32 %v1683, 1.0
  %v1690 = vadd.f32 %v1685, 1.0
  %v1691 = vadd.f32 %v1687, 1.0
  %v1692 = vrcp.pop %v1688
  %v1693 = vmul.f32 1.0, %v1692
  %v1694 = vrcp.pop %v1689
  %v1695 = vmul.f32 1.0, %v1694
  %v1696 = vrcp.pop %v1690
  %v1697 = vmul.f32 1.0, %v1696
  %v1698 = vrcp.pop %v1691
  %v1699 = vmul.f32 1.0, %v1698
  %v1700 = vtanh.pop %v1644
  %v1701 = vtanh.pop %v1645
  %v1702 = vtanh.pop %v1646
  %v1703 = vtanh.pop %v1647
  %v1704 = vxor.u32 %v1648, 2147483648
  %v1705 = vxor.u32 %v1649, 2147483648
  %v1706 = vxor.u32 %v1650, 2147483648
  %v1707 = vxor.u32 %v1651, 2147483648
  %v1708 = vmul.f32 %v1704, 1.442695
  %v1709 = vpow.pop %v1708
  %v1710 = vmul.f32 %v1705, 1.442695
  %v1711 = vpow.pop %v1710
  %v1712 = vmul.f32 %v1706, 1.442695
  %v1713 = vpow.pop %v1712
  %v1714 = vmul.f32 %v1707, 1.442695
  %v1715 = vpow.pop %v1714
  %v1716 = vadd.f32 %v1709, 1.0
  %v1717 = vadd.f32 %v1711, 1.0
  %v1718 = vadd.f32 %v1713, 1.0
  %v1719 = vadd.f32 %v1715, 1.0
  %v1720 = vrcp.pop %v1716
  %v1721 = vmul.f32 1.0, %v1720
  %v1722 = vrcp.pop %v1717
  %v1723 = vmul.f32 1.0, %v1722
  %v1724 = vrcp.pop %v1718
  %v1725 = vmul.f32 1.0, %v1724
  %v1726 = vrcp.pop %v1719
  %v1727 = vmul.f32 1.0, %v1726
  %v1728 = vmul.f32 %v1693, %v1462
  %v1729 = vmul.f32 %v1695, %v1463
  %v1730 = vmul.f32 %v1697, %v1464
  %v1731 = vmul.f32 %v1699, %v1465
  %v1732 = vmul.f32 %v1669, %v1700
  %v1733 = vmul.f32 %v1671, %v1701
  %v1734 = vmul.f32 %v1673, %v1702
  %v1735 = vmul.f32 %v1675, %v1703
  %v1736 = vadd.f32 %v1728, %v1732
  %v1737 = vadd.f32 %v1729, %v1733
  %v1738 = vadd.f32 %v1730, %v1734
  %v1739 = vadd.f32 %v1731, %v1735
  %v1740 = vtanh.pop %v1736
  %v1741 = vtanh.pop %v1737
  %v1742 = vtanh.pop %v1738
  %v1743 = vtanh.pop %v1739
  %v1744 = vmul.f32 %v1721, %v1740
  %v1745 = vmul.f32 %v1723, %v1741
  %v1746 = vmul.f32 %v1725, %v1742
  %v1747 = vmul.f32 %v1727, %v1743
  %s1748 = scalar_lea.vmem %s0, 768
  %v1749 = vld [vmem:[%s1748] sm:$0xff]
  %v1750 = vld [vmem:[%s1748 + $0x8] sm:$0xff]
  %v1751 = vld [vmem:[%s1748 + $0x10] sm:$0xff]
  %v1752 = vld [vmem:[%s1748 + $0x18] sm:$0xff]
  %v1753 = vld [vmem:[%s1748 + $0x20] sm:$0xff]
  %v1754 = vld [vmem:[%s1748 + $0x28] sm:$0xff]
  %v1755 = vld [vmem:[%s1748 + $0x30] sm:$0xff]
  %v1756 = vld [vmem:[%s1748 + $0x38] sm:$0xff]
  %v1757 = vld [vmem:[%s1748 + $0x40] sm:$0xff]
  %v1758 = vld [vmem:[%s1748 + $0x48] sm:$0xff]
  %v1759 = vld [vmem:[%s1748 + $0x50] sm:$0xff]
  %v1760 = vld [vmem:[%s1748 + $0x58] sm:$0xff]
  %v1761 = vld [vmem:[%s1748 + $0x60] sm:$0xff]
  %v1762 = vld [vmem:[%s1748 + $0x68] sm:$0xff]
  %v1763 = vld [vmem:[%s1748 + $0x70] sm:$0xff]
  %v1764 = vld [vmem:[%s1748 + $0x78] sm:$0xff]
  %1765 = vmatprep.subr.mxu0 0.0
  %1766 = vmatpush1.msra.mxu0 0.0
  %1767 = vmatprep.subr.mxu0 0.0
  %1768 = vmatpush1.msra.mxu0 0.0
  %1769 = vmatprep.subr.mxu0 0.0
  %1770 = vmatpush1.msra.mxu0 0.0
  %1771 = vmatprep.subr.mxu0 0.0
  %1772 = vmatpush1.msra.mxu0 0.0
  %1773 = vmatprep.subr.mxu0 0.0
  %1774 = vmatpush1.msra.mxu0 0.0
  %1775 = vmatprep.subr.mxu0 0.0
  %1776 = vmatpush1.msra.mxu0 0.0
  %1777 = vmatprep.subr.mxu0 0.0
  %1778 = vmatpush1.msra.mxu0 0.0
  %1779 = vmatprep.subr.mxu0 0.0
  %1780 = vmatpush1.msra.mxu0 0.0
  %1781 = vmatprep.subr.mxu0 0.0
  %1782 = vmatpush1.msra.mxu0 0.0
  %1783 = vmatprep.subr.mxu0 0.0
  %1784 = vmatpush1.msra.mxu0 0.0
  %1785 = vmatprep.subr.mxu0 0.0
  %1786 = vmatpush1.msra.mxu0 0.0
  %1787 = vmatprep.subr.mxu0 0.0
  %1788 = vmatpush1.msra.mxu0 0.0
  %1789 = vmatprep.subr.mxu0 0.0
  %1790 = vmatpush1.msra.mxu0 %v1747
  %1791 = vmatprep.subr.mxu0 0.0
  %1792 = vmatpush1.msra.mxu0 %v1746
  %1793 = vmatprep.subr.mxu0 0.0
  %1794 = vmatpush1.msra.mxu0 %v1745
  %1795 = vmatprep.subr.mxu0 0.0
  %1796 = vmatpush1.msra.mxu0 %v1744
  %1797 = vmatprep.subr.mxu0 0.0
  %1798 = vmatpush2.msra.mxu0 0.0
  %1799 = vmatprep.subr.mxu0 0.0
  %1800 = vmatpush2.msra.mxu0 0.0
  %1801 = vmatprep.subr.mxu0 0.0
  %1802 = vmatpush2.msra.mxu0 0.0
  %1803 = vmatprep.subr.mxu0 0.0
  %1804 = vmatpush2.msra.mxu0 0.0
  %1805 = vmatprep.subr.mxu0 0.0
  %1806 = vmatpush2.msra.mxu0 0.0
  %1807 = vmatprep.subr.mxu0 0.0
  %1808 = vmatpush2.msra.mxu0 0.0
  %1809 = vmatprep.subr.mxu0 0.0
  %1810 = vmatpush2.msra.mxu0 0.0
  %1811 = vmatprep.subr.mxu0 0.0
  %1812 = vmatpush2.msra.mxu0 0.0
  %1813 = vmatprep.subr.mxu0 0.0
  %1814 = vmatpush2.msra.mxu0 0.0
  %1815 = vmatprep.subr.mxu0 0.0
  %1816 = vmatpush2.msra.mxu0 0.0
  %1817 = vmatprep.subr.mxu0 0.0
  %1818 = vmatpush2.msra.mxu0 0.0
  %1819 = vmatprep.subr.mxu0 0.0
  %1820 = vmatpush2.msra.mxu0 0.0
  %1821 = vmatprep.subr.mxu0 0.0
  %1822 = vmatpush2.msra.mxu0 0.0
  %1823 = vmatprep.subr.mxu0 0.0
  %1824 = vmatpush2.msra.mxu0 0.0
  %1825 = vmatprep.subr.mxu0 0.0
  %1826 = vmatpush2.msra.mxu0 0.0
  %1827 = vmatprep.subr.mxu0 0.0
  %1828 = vmatpush2.msra.mxu0 0.0
  %1829 = vmatprep.mubr.f32.mxu0 0.0
  %1830 = vmatmul.mubr.f32.gmra.mxu0 %v74
  %v1831 = vpop.f32.mrf.mxu0
  %v1832 = vadd.f32 0.0, %v1831
  %v1833 = vpop.f32.mrf.mxu0
  %1834 = vmatprep.mubr.f32.mxu0 0.0
  %1835 = vmatmul.mubr.f32.gmra.mxu0 %v77
  %v1836 = vpop.f32.mrf.mxu0
  %v1837 = vadd.f32 0.0, %v1836
  %v1838 = vpop.f32.mrf.mxu0
  %1839 = vmatprep.mubr.f32.mxu0 0.0
  %1840 = vmatmul.mubr.f32.gmra.mxu0 %v80
  %v1841 = vpop.f32.mrf.mxu0
  %v1842 = vadd.f32 0.0, %v1841
  %v1843 = vpop.f32.mrf.mxu0
  %1844 = vmatprep.mubr.f32.mxu0 0.0
  %1845 = vmatmul.mubr.f32.gmra.mxu0 %v83
  %v1846 = vpop.f32.mrf.mxu0
  %v1847 = vadd.f32 0.0, %v1846
  %v1848 = vpop.f32.mrf.mxu0
  %1849 = vmatprep.mubr.f32.mxu0 0.0
  %1850 = vmatmul.mubr.f32.gmra.mxu0 %v86
  %v1851 = vpop.f32.mrf.mxu0
  %v1852 = vadd.f32 0.0, %v1851
  %v1853 = vpop.f32.mrf.mxu0
  %1854 = vmatprep.mubr.f32.mxu0 0.0
  %1855 = vmatmul.mubr.f32.gmra.mxu0 %v89
  %v1856 = vpop.f32.mrf.mxu0
  %v1857 = vadd.f32 0.0, %v1856
  %v1858 = vpop.f32.mrf.mxu0
  %1859 = vmatprep.mubr.f32.mxu0 0.0
  %1860 = vmatmul.mubr.f32.gmra.mxu0 %v92
  %v1861 = vpop.f32.mrf.mxu0
  %v1862 = vadd.f32 0.0, %v1861
  %v1863 = vpop.f32.mrf.mxu0
  %1864 = vmatprep.mubr.f32.mxu0 0.0
  %1865 = vmatmul.mubr.f32.gmra.mxu0 %v95
  %v1866 = vpop.f32.mrf.mxu0
  %v1867 = vadd.f32 0.0, %v1866
  %v1868 = vpop.f32.mrf.mxu0
  %1869 = vmatprep.mubr.f32.mxu0 0.0
  %1870 = vmatmul.mubr.f32.gmra.mxu0 %v98
  %v1871 = vpop.f32.mrf.mxu0
  %v1872 = vadd.f32 0.0, %v1871
  %v1873 = vpop.f32.mrf.mxu0
  %1874 = vmatprep.mubr.f32.mxu0 0.0
  %1875 = vmatmul.mubr.f32.gmra.mxu0 %v101
  %v1876 = vpop.f32.mrf.mxu0
  %v1877 = vadd.f32 0.0, %v1876
  %v1878 = vpop.f32.mrf.mxu0
  %1879 = vmatprep.mubr.f32.mxu0 0.0
  %1880 = vmatmul.mubr.f32.gmra.mxu0 %v104
  %v1881 = vpop.f32.mrf.mxu0
  %v1882 = vadd.f32 0.0, %v1881
  %v1883 = vpop.f32.mrf.mxu0
  %1884 = vmatprep.mubr.f32.mxu0 0.0
  %1885 = vmatmul.mubr.f32.gmra.mxu0 %v107
  %v1886 = vpop.f32.mrf.mxu0
  %v1887 = vadd.f32 0.0, %v1886
  %v1888 = vpop.f32.mrf.mxu0
  %1889 = vmatprep.mubr.f32.mxu0 0.0
  %1890 = vmatmul.mubr.f32.gmra.mxu0 %v110
  %v1891 = vpop.f32.mrf.mxu0
  %v1892 = vadd.f32 0.0, %v1891
  %v1893 = vpop.f32.mrf.mxu0
  %1894 = vmatprep.mubr.f32.mxu0 0.0
  %1895 = vmatmul.mubr.f32.gmra.mxu0 %v113
  %v1896 = vpop.f32.mrf.mxu0
  %v1897 = vadd.f32 0.0, %v1896
  %v1898 = vpop.f32.mrf.mxu0
  %1899 = vmatprep.mubr.f32.mxu0 0.0
  %1900 = vmatmul.mubr.f32.gmra.mxu0 %v116
  %v1901 = vpop.f32.mrf.mxu0
  %v1902 = vadd.f32 0.0, %v1901
  %v1903 = vpop.f32.mrf.mxu0
  %1904 = vmatprep.mubr.f32.mxu0 0.0
  %1905 = vmatmul.mubr.f32.gmra.mxu0 %v119
  %v1906 = vpop.f32.mrf.mxu0
  %v1907 = vadd.f32 0.0, %v1906
  %v1908 = vpop.f32.mrf.mxu0
  %1909 = vdwg.mxu0
  %v1910 = vadd.f32 %v1749, %v1832
  %v1911 = vadd.f32 %v1750, %v1837
  %v1912 = vadd.f32 %v1751, %v1842
  %v1913 = vadd.f32 %v1752, %v1847
  %v1914 = vadd.f32 %v1753, %v1852
  %v1915 = vadd.f32 %v1754, %v1857
  %v1916 = vadd.f32 %v1755, %v1862
  %v1917 = vadd.f32 %v1756, %v1867
  %v1918 = vadd.f32 %v1757, %v1872
  %v1919 = vadd.f32 %v1758, %v1877
  %v1920 = vadd.f32 %v1759, %v1882
  %v1921 = vadd.f32 %v1760, %v1887
  %v1922 = vadd.f32 %v1761, %v1892
  %v1923 = vadd.f32 %v1762, %v1897
  %v1924 = vadd.f32 %v1763, %v1902
  %v1925 = vadd.f32 %v1764, %v1907
  %v1926 = vxor.u32 %v1910, 2147483648
  %v1927 = vxor.u32 %v1911, 2147483648
  %v1928 = vxor.u32 %v1912, 2147483648
  %v1929 = vxor.u32 %v1913, 2147483648
  %v1930 = vmul.f32 %v1926, 1.442695
  %v1931 = vpow.pop %v1930
  %v1932 = vmul.f32 %v1927, 1.442695
  %v1933 = vpow.pop %v1932
  %v1934 = vmul.f32 %v1928, 1.442695
  %v1935 = vpow.pop %v1934
  %v1936 = vmul.f32 %v1929, 1.442695
  %v1937 = vpow.pop %v1936
  %v1938 = vadd.f32 %v1931, 1.0
  %v1939 = vadd.f32 %v1933, 1.0
  %v1940 = vadd.f32 %v1935, 1.0
  %v1941 = vadd.f32 %v1937, 1.0
  %v1942 = vrcp.pop %v1938
  %v1943 = vmul.f32 1.0, %v1942
  %v1944 = vrcp.pop %v1939
  %v1945 = vmul.f32 1.0, %v1944
  %v1946 = vrcp.pop %v1940
  %v1947 = vmul.f32 1.0, %v1946
  %v1948 = vrcp.pop %v1941
  %v1949 = vmul.f32 1.0, %v1948
  %v1950 = vxor.u32 %v1914, 2147483648
  %v1951 = vxor.u32 %v1915, 2147483648
  %v1952 = vxor.u32 %v1916, 2147483648
  %v1953 = vxor.u32 %v1917, 2147483648
  %v1954 = vmul.f32 %v1950, 1.442695
  %v1955 = vpow.pop %v1954
  %v1956 = vmul.f32 %v1951, 1.442695
  %v1957 = vpow.pop %v1956
  %v1958 = vmul.f32 %v1952, 1.442695
  %v1959 = vpow.pop %v1958
  %v1960 = vmul.f32 %v1953, 1.442695
  %v1961 = vpow.pop %v1960
  %v1962 = vadd.f32 %v1955, 1.0
  %v1963 = vadd.f32 %v1957, 1.0
  %v1964 = vadd.f32 %v1959, 1.0
  %v1965 = vadd.f32 %v1961, 1.0
  %v1966 = vrcp.pop %v1962
  %v1967 = vmul.f32 1.0, %v1966
  %v1968 = vrcp.pop %v1963
  %v1969 = vmul.f32 1.0, %v1968
  %v1970 = vrcp.pop %v1964
  %v1971 = vmul.f32 1.0, %v1970
  %v1972 = vrcp.pop %v1965
  %v1973 = vmul.f32 1.0, %v1972
  %v1974 = vtanh.pop %v1918
  %v1975 = vtanh.pop %v1919
  %v1976 = vtanh.pop %v1920
  %v1977 = vtanh.pop %v1921
  %v1978 = vxor.u32 %v1922, 2147483648
  %v1979 = vxor.u32 %v1923, 2147483648
  %v1980 = vxor.u32 %v1924, 2147483648
  %v1981 = vxor.u32 %v1925, 2147483648
  %v1982 = vmul.f32 %v1978, 1.442695
  %v1983 = vpow.pop %v1982
  %v1984 = vmul.f32 %v1979, 1.442695
  %v1985 = vpow.pop %v1984
  %v1986 = vmul.f32 %v1980, 1.442695
  %v1987 = vpow.pop %v1986
  %v1988 = vmul.f32 %v1981, 1.442695
  %v1989 = vpow.pop %v1988
  %v1990 = vadd.f32 %v1983, 1.0
  %v1991 = vadd.f32 %v1985, 1.0
  %v1992 = vadd.f32 %v1987, 1.0
  %v1993 = vadd.f32 %v1989, 1.0
  %v1994 = vrcp.pop %v1990
  %v1995 = vmul.f32 1.0, %v1994
  %v1996 = vrcp.pop %v1991
  %v1997 = vmul.f32 1.0, %v1996
  %v1998 = vrcp.pop %v1992
  %v1999 = vmul.f32 1.0, %v1998
  %v2000 = vrcp.pop %v1993
  %v2001 = vmul.f32 1.0, %v2000
  %v2002 = vmul.f32 %v1967, %v1736
  %v2003 = vmul.f32 %v1969, %v1737
  %v2004 = vmul.f32 %v1971, %v1738
  %v2005 = vmul.f32 %v1973, %v1739
  %v2006 = vmul.f32 %v1943, %v1974
  %v2007 = vmul.f32 %v1945, %v1975
  %v2008 = vmul.f32 %v1947, %v1976
  %v2009 = vmul.f32 %v1949, %v1977
  %v2010 = vadd.f32 %v2002, %v2006
  %v2011 = vadd.f32 %v2003, %v2007
  %v2012 = vadd.f32 %v2004, %v2008
  %v2013 = vadd.f32 %v2005, %v2009
  %v2014 = vtanh.pop %v2010
  %v2015 = vtanh.pop %v2011
  %v2016 = vtanh.pop %v2012
  %v2017 = vtanh.pop %v2013
  %v2018 = vmul.f32 %v1995, %v2014
  %v2019 = vmul.f32 %v1997, %v2015
  %v2020 = vmul.f32 %v1999, %v2016
  %v2021 = vmul.f32 %v2001, %v2017
  %s2022 = scalar_lea.vmem %s0, 896
  %v2023 = vld [vmem:[%s2022] sm:$0xff]
  %v2024 = vld [vmem:[%s2022 + $0x8] sm:$0xff]
  %v2025 = vld [vmem:[%s2022 + $0x10] sm:$0xff]
  %v2026 = vld [vmem:[%s2022 + $0x18] sm:$0xff]
  %v2027 = vld [vmem:[%s2022 + $0x20] sm:$0xff]
  %v2028 = vld [vmem:[%s2022 + $0x28] sm:$0xff]
  %v2029 = vld [vmem:[%s2022 + $0x30] sm:$0xff]
  %v2030 = vld [vmem:[%s2022 + $0x38] sm:$0xff]
  %v2031 = vld [vmem:[%s2022 + $0x40] sm:$0xff]
  %v2032 = vld [vmem:[%s2022 + $0x48] sm:$0xff]
  %v2033 = vld [vmem:[%s2022 + $0x50] sm:$0xff]
  %v2034 = vld [vmem:[%s2022 + $0x58] sm:$0xff]
  %v2035 = vld [vmem:[%s2022 + $0x60] sm:$0xff]
  %v2036 = vld [vmem:[%s2022 + $0x68] sm:$0xff]
  %v2037 = vld [vmem:[%s2022 + $0x70] sm:$0xff]
  %v2038 = vld [vmem:[%s2022 + $0x78] sm:$0xff]
  %2039 = vmatprep.subr.mxu0 0.0
  %2040 = vmatpush1.msra.mxu0 0.0
  %2041 = vmatprep.subr.mxu0 0.0
  %2042 = vmatpush1.msra.mxu0 0.0
  %2043 = vmatprep.subr.mxu0 0.0
  %2044 = vmatpush1.msra.mxu0 0.0
  %2045 = vmatprep.subr.mxu0 0.0
  %2046 = vmatpush1.msra.mxu0 0.0
  %2047 = vmatprep.subr.mxu0 0.0
  %2048 = vmatpush1.msra.mxu0 0.0
  %2049 = vmatprep.subr.mxu0 0.0
  %2050 = vmatpush1.msra.mxu0 0.0
  %2051 = vmatprep.subr.mxu0 0.0
  %2052 = vmatpush1.msra.mxu0 0.0
  %2053 = vmatprep.subr.mxu0 0.0
  %2054 = vmatpush1.msra.mxu0 0.0
  %2055 = vmatprep.subr.mxu0 0.0
  %2056 = vmatpush1.msra.mxu0 0.0
  %2057 = vmatprep.subr.mxu0 0.0
  %2058 = vmatpush1.msra.mxu0 0.0
  %2059 = vmatprep.subr.mxu0 0.0
  %2060 = vmatpush1.msra.mxu0 0.0
  %2061 = vmatprep.subr.mxu0 0.0
  %2062 = vmatpush1.msra.mxu0 0.0
  %2063 = vmatprep.subr.mxu0 0.0
  %2064 = vmatpush1.msra.mxu0 %v2021
  %2065 = vmatprep.subr.mxu0 0.0
  %2066 = vmatpush1.msra.mxu0 %v2020
  %2067 = vmatprep.subr.mxu0 0.0
  %2068 = vmatpush1.msra.mxu0 %v2019
  %2069 = vmatprep.subr.mxu0 0.0
  %2070 = vmatpush1.msra.mxu0 %v2018
  %2071 = vmatprep.subr.mxu0 0.0
  %2072 = vmatpush2.msra.mxu0 0.0
  %2073 = vmatprep.subr.mxu0 0.0
  %2074 = vmatpush2.msra.mxu0 0.0
  %2075 = vmatprep.subr.mxu0 0.0
  %2076 = vmatpush2.msra.mxu0 0.0
  %2077 = vmatprep.subr.mxu0 0.0
  %2078 = vmatpush2.msra.mxu0 0.0
  %2079 = vmatprep.subr.mxu0 0.0
  %2080 = vmatpush2.msra.mxu0 0.0
  %2081 = vmatprep.subr.mxu0 0.0
  %2082 = vmatpush2.msra.mxu0 0.0
  %2083 = vmatprep.subr.mxu0 0.0
  %2084 = vmatpush2.msra.mxu0 0.0
  %2085 = vmatprep.subr.mxu0 0.0
  %2086 = vmatpush2.msra.mxu0 0.0
  %2087 = vmatprep.subr.mxu0 0.0
  %2088 = vmatpush2.msra.mxu0 0.0
  %2089 = vmatprep.subr.mxu0 0.0
  %2090 = vmatpush2.msra.mxu0 0.0
  %2091 = vmatprep.subr.mxu0 0.0
  %2092 = vmatpush2.msra.mxu0 0.0
  %2093 = vmatprep.subr.mxu0 0.0
  %2094 = vmatpush2.msra.mxu0 0.0
  %2095 = vmatprep.subr.mxu0 0.0
  %2096 = vmatpush2.msra.mxu0 0.0
  %2097 = vmatprep.subr.mxu0 0.0
  %2098 = vmatpush2.msra.mxu0 0.0
  %2099 = vmatprep.subr.mxu0 0.0
  %2100 = vmatpush2.msra.mxu0 0.0
  %2101 = vmatprep.subr.mxu0 0.0
  %2102 = vmatpush2.msra.mxu0 0.0
  %2103 = vmatprep.mubr.f32.mxu0 0.0
  %2104 = vmatmul.mubr.f32.gmra.mxu0 %v74
  %v2105 = vpop.f32.mrf.mxu0
  %v2106 = vadd.f32 0.0, %v2105
  %v2107 = vpop.f32.mrf.mxu0
  %2108 = vmatprep.mubr.f32.mxu0 0.0
  %2109 = vmatmul.mubr.f32.gmra.mxu0 %v77
  %v2110 = vpop.f32.mrf.mxu0
  %v2111 = vadd.f32 0.0, %v2110
  %v2112 = vpop.f32.mrf.mxu0
  %2113 = vmatprep.mubr.f32.mxu0 0.0
  %2114 = vmatmul.mubr.f32.gmra.mxu0 %v80
  %v2115 = vpop.f32.mrf.mxu0
  %v2116 = vadd.f32 0.0, %v2115
  %v2117 = vpop.f32.mrf.mxu0
  %2118 = vmatprep.mubr.f32.mxu0 0.0
  %2119 = vmatmul.mubr.f32.gmra.mxu0 %v83
  %v2120 = vpop.f32.mrf.mxu0
  %v2121 = vadd.f32 0.0, %v2120
  %v2122 = vpop.f32.mrf.mxu0
  %2123 = vmatprep.mubr.f32.mxu0 0.0
  %2124 = vmatmul.mubr.f32.gmra.mxu0 %v86
  %v2125 = vpop.f32.mrf.mxu0
  %v2126 = vadd.f32 0.0, %v2125
  %v2127 = vpop.f32.mrf.mxu0
  %2128 = vmatprep.mubr.f32.mxu0 0.0
  %2129 = vmatmul.mubr.f32.gmra.mxu0 %v89
  %v2130 = vpop.f32.mrf.mxu0
  %v2131 = vadd.f32 0.0, %v2130
  %v2132 = vpop.f32.mrf.mxu0
  %2133 = vmatprep.mubr.f32.mxu0 0.0
  %2134 = vmatmul.mubr.f32.gmra.mxu0 %v92
  %v2135 = vpop.f32.mrf.mxu0
  %v2136 = vadd.f32 0.0, %v2135
  %v2137 = vpop.f32.mrf.mxu0
  %2138 = vmatprep.mubr.f32.mxu0 0.0
  %2139 = vmatmul.mubr.f32.gmra.mxu0 %v95
  %v2140 = vpop.f32.mrf.mxu0
  %v2141 = vadd.f32 0.0, %v2140
  %v2142 = vpop.f32.mrf.mxu0
  %2143 = vmatprep.mubr.f32.mxu0 0.0
  %2144 = vmatmul.mubr.f32.gmra.mxu0 %v98
  %v2145 = vpop.f32.mrf.mxu0
  %v2146 = vadd.f32 0.0, %v2145
  %v2147 = vpop.f32.mrf.mxu0
  %2148 = vmatprep.mubr.f32.mxu0 0.0
  %2149 = vmatmul.mubr.f32.gmra.mxu0 %v101
  %v2150 = vpop.f32.mrf.mxu0
  %v2151 = vadd.f32 0.0, %v2150
  %v2152 = vpop.f32.mrf.mxu0
  %2153 = vmatprep.mubr.f32.mxu0 0.0
  %2154 = vmatmul.mubr.f32.gmra.mxu0 %v104
  %v2155 = vpop.f32.mrf.mxu0
  %v2156 = vadd.f32 0.0, %v2155
  %v2157 = vpop.f32.mrf.mxu0
  %2158 = vmatprep.mubr.f32.mxu0 0.0
  %2159 = vmatmul.mubr.f32.gmra.mxu0 %v107
  %v2160 = vpop.f32.mrf.mxu0
  %v2161 = vadd.f32 0.0, %v2160
  %v2162 = vpop.f32.mrf.mxu0
  %2163 = vmatprep.mubr.f32.mxu0 0.0
  %2164 = vmatmul.mubr.f32.gmra.mxu0 %v110
  %v2165 = vpop.f32.mrf.mxu0
  %v2166 = vadd.f32 0.0, %v2165
  %v2167 = vpop.f32.mrf.mxu0
  %2168 = vmatprep.mubr.f32.mxu0 0.0
  %2169 = vmatmul.mubr.f32.gmra.mxu0 %v113
  %v2170 = vpop.f32.mrf.mxu0
  %v2171 = vadd.f32 0.0, %v2170
  %v2172 = vpop.f32.mrf.mxu0
  %2173 = vmatprep.mubr.f32.mxu0 0.0
  %2174 = vmatmul.mubr.f32.gmra.mxu0 %v116
  %v2175 = vpop.f32.mrf.mxu0
  %v2176 = vadd.f32 0.0, %v2175
  %v2177 = vpop.f32.mrf.mxu0
  %2178 = vmatprep.mubr.f32.mxu0 0.0
  %2179 = vmatmul.mubr.f32.gmra.mxu0 %v119
  %v2180 = vpop.f32.mrf.mxu0
  %v2181 = vadd.f32 0.0, %v2180
  %v2182 = vpop.f32.mrf.mxu0
  %2183 = vdwg.mxu0
  %v2184 = vadd.f32 %v2023, %v2106
  %v2185 = vadd.f32 %v2024, %v2111
  %v2186 = vadd.f32 %v2025, %v2116
  %v2187 = vadd.f32 %v2026, %v2121
  %v2188 = vadd.f32 %v2027, %v2126
  %v2189 = vadd.f32 %v2028, %v2131
  %v2190 = vadd.f32 %v2029, %v2136
  %v2191 = vadd.f32 %v2030, %v2141
  %v2192 = vadd.f32 %v2031, %v2146
  %v2193 = vadd.f32 %v2032, %v2151
  %v2194 = vadd.f32 %v2033, %v2156
  %v2195 = vadd.f32 %v2034, %v2161
  %v2196 = vadd.f32 %v2035, %v2166
  %v2197 = vadd.f32 %v2036, %v2171
  %v2198 = vadd.f32 %v2037, %v2176
  %v2199 = vadd.f32 %v2038, %v2181
  %v2200 = vxor.u32 %v2184, 2147483648
  %v2201 = vxor.u32 %v2185, 2147483648
  %v2202 = vxor.u32 %v2186, 2147483648
  %v2203 = vxor.u32 %v2187, 2147483648
  %v2204 = vmul.f32 %v2200, 1.442695
  %v2205 = vpow.pop %v2204
  %v2206 = vmul.f32 %v2201, 1.442695
  %v2207 = vpow.pop %v2206
  %v2208 = vmul.f32 %v2202, 1.442695
  %v2209 = vpow.pop %v2208
  %v2210 = vmul.f32 %v2203, 1.442695
  %v2211 = vpow.pop %v2210
  %v2212 = vadd.f32 %v2205, 1.0
  %v2213 = vadd.f32 %v2207, 1.0
  %v2214 = vadd.f32 %v2209, 1.0
  %v2215 = vadd.f32 %v2211, 1.0
  %v2216 = vrcp.pop %v2212
  %v2217 = vmul.f32 1.0, %v2216
  %v2218 = vrcp.pop %v2213
  %v2219 = vmul.f32 1.0, %v2218
  %v2220 = vrcp.pop %v2214
  %v2221 = vmul.f32 1.0, %v2220
  %v2222 = vrcp.pop %v2215
  %v2223 = vmul.f32 1.0, %v2222
  %v2224 = vxor.u32 %v2188, 2147483648
  %v2225 = vxor.u32 %v2189, 2147483648
  %v2226 = vxor.u32 %v2190, 2147483648
  %v2227 = vxor.u32 %v2191, 2147483648
  %v2228 = vmul.f32 %v2224, 1.442695
  %v2229 = vpow.pop %v2228
  %v2230 = vmul.f32 %v2225, 1.442695
  %v2231 = vpow.pop %v2230
  %v2232 = vmul.f32 %v2226, 1.442695
  %v2233 = vpow.pop %v2232
  %v2234 = vmul.f32 %v2227, 1.442695
  %v2235 = vpow.pop %v2234
  %v2236 = vadd.f32 %v2229, 1.0
  %v2237 = vadd.f32 %v2231, 1.0
  %v2238 = vadd.f32 %v2233, 1.0
  %v2239 = vadd.f32 %v2235, 1.0
  %v2240 = vrcp.pop %v2236
  %v2241 = vmul.f32 1.0, %v2240
  %v2242 = vrcp.pop %v2237
  %v2243 = vmul.f32 1.0, %v2242
  %v2244 = vrcp.pop %v2238
  %v2245 = vmul.f32 1.0, %v2244
  %v2246 = vrcp.pop %v2239
  %v2247 = vmul.f32 1.0, %v2246
  %v2248 = vtanh.pop %v2192
  %v2249 = vtanh.pop %v2193
  %v2250 = vtanh.pop %v2194
  %v2251 = vtanh.pop %v2195
  %v2252 = vxor.u32 %v2196, 2147483648
  %v2253 = vxor.u32 %v2197, 2147483648
  %v2254 = vxor.u32 %v2198, 2147483648
  %v2255 = vxor.u32 %v2199, 2147483648
  %v2256 = vmul.f32 %v2252, 1.442695
  %v2257 = vpow.pop %v2256
  %v2258 = vmul.f32 %v2253, 1.442695
  %v2259 = vpow.pop %v2258
  %v2260 = vmul.f32 %v2254, 1.442695
  %v2261 = vpow.pop %v2260
  %v2262 = vmul.f32 %v2255, 1.442695
  %v2263 = vpow.pop %v2262
  %v2264 = vadd.f32 %v2257, 1.0
  %v2265 = vadd.f32 %v2259, 1.0
  %v2266 = vadd.f32 %v2261, 1.0
  %v2267 = vadd.f32 %v2263, 1.0
  %v2268 = vrcp.pop %v2264
  %v2269 = vmul.f32 1.0, %v2268
  %v2270 = vrcp.pop %v2265
  %v2271 = vmul.f32 1.0, %v2270
  %v2272 = vrcp.pop %v2266
  %v2273 = vmul.f32 1.0, %v2272
  %v2274 = vrcp.pop %v2267
  %v2275 = vmul.f32 1.0, %v2274
  %v2276 = vmul.f32 %v2241, %v2010
  %v2277 = vmul.f32 %v2243, %v2011
  %v2278 = vmul.f32 %v2245, %v2012
  %v2279 = vmul.f32 %v2247, %v2013
  %v2280 = vmul.f32 %v2217, %v2248
  %v2281 = vmul.f32 %v2219, %v2249
  %v2282 = vmul.f32 %v2221, %v2250
  %v2283 = vmul.f32 %v2223, %v2251
  %v2284 = vadd.f32 %v2276, %v2280
  %v2285 = vadd.f32 %v2277, %v2281
  %v2286 = vadd.f32 %v2278, %v2282
  %v2287 = vadd.f32 %v2279, %v2283
  %v2288 = vtanh.pop %v2284
  %v2289 = vtanh.pop %v2285
  %v2290 = vtanh.pop %v2286
  %v2291 = vtanh.pop %v2287
  %v2292 = vmul.f32 %v2269, %v2288
  %v2293 = vmul.f32 %v2271, %v2289
  %v2294 = vmul.f32 %v2273, %v2290
  %v2295 = vmul.f32 %v2275, %v2291
  %vm2296 = vcmask 64512
  %2297 = vst.msk [vmem:[#allocation2] sm:$0xff] %vm2296, %v2292
  %2298 = vst.msk [vmem:[#allocation2 + $0x8] sm:$0xff] %vm2296, %v2293
  %2299 = vst.msk [vmem:[#allocation2 + $0x10] sm:$0xff] %vm2296, %v2294
  %2300 = vst.msk [vmem:[#allocation2 + $0x18] sm:$0xff] %vm2296, %v2295
  %2301 = vst.msk [vmem:[#allocation3] sm:$0xff] %vm2296, %v2284
  %2302 = vst.msk [vmem:[#allocation3 + $0x8] sm:$0xff] %vm2296, %v2285
  %2303 = vst.msk [vmem:[#allocation3 + $0x10] sm:$0xff] %vm2296, %v2286
  %2304 = vst.msk [vmem:[#allocation3 + $0x18] sm:$0xff] %vm2296, %v2287
  // Predicated region
  $region22: #{shallow_regression_lstm_forward.1} parent=0 // pred_check
    %p2305 = pneg %p19
  $region23: #{shallow_regression_lstm_forward.1} parent=0 // pred_check_branch
    %2307 = sbr.rel (%p2305) target = $region25
  $region24: #{shallow_regression_lstm_forward.1} parent=0 // pred_region
    %v2308 = vld [vmem:[%s2] sm:$0xff]
    %v2309 = vld [vmem:[%s2 + $0x8] sm:$0xff]
    %v2310 = vld [vmem:[%s2 + $0x10] sm:$0xff]
    %v2311 = vld [vmem:[%s2 + $0x18] sm:$0xff]
    %2313 = vset.pattern.permute.xlu0 0
    %2314 = vperm.xlu0 %2313, %v2308
    %v2315 = vpop.permute.xlu0 %2314
    %2318 = vset.pattern.permute.xlu0 0
    %2319 = vperm.xlu0 %2318, %v2309
    %v2320 = vpop.permute.xlu0 %2319
    %2323 = vset.pattern.permute.xlu0 0
    %2324 = vperm.xlu0 %2323, %v2310
    %v2325 = vpop.permute.xlu0 %2324
    %2328 = vset.pattern.permute.xlu0 0
    %2329 = vperm.xlu0 %2328, %v2311
    %v2330 = vpop.permute.xlu0 %2329
    %v2332 = vmul.f32 %v2292, %v2315
    %v2333 = vmul.f32 %v2293, %v2320
    %v2334 = vmul.f32 %v2294, %v2325
    %v2335 = vmul.f32 %v2295, %v2330
    %v2336 = vsel %vm2296, %v2332, 0.0
    %v2337 = vsel %vm2296, %v2333, 0.0
    %v2338 = vadd.f32 %v2336, %v2337
    %v2339 = vsel %vm2296, %v2334, 0.0
    %v2340 = vadd.f32 %v2338, %v2339
    %v2341 = vsel %vm2296, %v2335, 0.0
    %v2342 = vadd.f32 %v2340, %v2341
    %v2343 = vrot.slane %v2342, 4
    %v2344 = vadd.f32 %v2342, %v2343
    %v2345 = vrot.slane %v2344, 2
    %v2346 = vadd.f32 %v2344, %v2345
    %v2347 = vrot.slane %v2346, 1
    %v2348 = vadd.f32 %v2346, %v2347
    %v2349 = vld [vmem:[#allocation4] sm:$0x1]
    %2351 = vset.pattern.permute.xlu0 0
    %2352 = vperm.xlu0 %2351, %v2349
    %v2353 = vpop.permute.xlu0 %2352
    %v2355 = vlaneseq
    %v2356 = vshrl.u32 %v2355, 7
    %v2357 = vsub.s32 0, %v2356
    %v2358 = vrot.slane %v2353, %v2357
    %v2359 = vadd.f32 %v2348, %v2358
    %vm2360 = vcmask 57344
    %2361 = vst.msk [vmem:[%s4] sm:$0x1] %vm2360, %v2359
  $region25: #{shallow_regression_lstm_forward.1} parent=0 // pred_fallthru
    _
  // Predicated region
  $region26: #{shallow_regression_lstm_forward.1} parent=0 // pred_check
    _
  $region27: #{shallow_regression_lstm_forward.1} parent=0 // pred_check_branch
    %2363 = sbr.rel (0) target = $region29
  $region28: #{shallow_regression_lstm_forward.1} parent=0 // pred_region
    _
  $region29: #{shallow_regression_lstm_forward.1} parent=0 // pred_fallthru
    _
  // Predicated region
  $region30: #{shallow_regression_lstm_forward.1} parent=0 // pred_check
    _
  $region31: #{shallow_regression_lstm_forward.1} parent=0 // pred_check_branch
    %2365 = sbr.rel (0) target = $region33
  $region32: #{shallow_regression_lstm_forward.1} parent=0 // pred_region
    _
  $region33: #{shallow_regression_lstm_forward.1} parent=0 // pred_fallthru
    _

</llo_original>
